<compile_context>
chip_gen: v6e
topology: v6e:2x2x1
jax: 0.10.0
libtpu: 0.0.40
codegen_flags: <defaults>
</compile_context>

<pallas_src>
import jax
import jax.numpy as jnp
from jax import lax
from jax.experimental import pallas as pl
from jax.experimental.pallas import tpu as pltpu


# ----------------------------- fused Pallas kernel -----------------------------

def _make_fused_kernel(B, T, H, L):
    """Fused forward kernel for padded batch B, seq len T, hidden H, L layers."""
    G4 = 4 * H
    G8 = 8 * H

    def kernel(*refs):
        ids_ref, emb_ref = refs[0], refs[1]
        layer_refs = [refs[2 + 3 * l: 5 + 3 * l] for l in range(L)]
        wcls_ref, bcls_ref = refs[2 + 3 * L], refs[3 + 3 * L]
        out_ref = refs[4 + 3 * L]

        V = emb_ref.shape[0]  # lane-padded vocab

        # ---- hoisted compile-time lane masks (built exactly once per kernel) ----
        lane4 = lax.broadcasted_iota(jnp.int32, (B, G4), 1)
        gmask_1dir = (lane4 >= 2 * H) & (lane4 < 3 * H)            # g lanes, 1 direction
        if L > 1:
            lane8 = lax.broadcasted_iota(jnp.int32, (B, G8), 1)
            gmask_2dir = (lane8 >= 4 * H) & (lane8 < 6 * H)        # g lanes, fused layout
            fwd_cols = ((lane8 < H)
                        | ((lane8 >= 2 * H) & (lane8 < 3 * H))
                        | ((lane8 >= 4 * H) & (lane8 < 5 * H))
                        | ((lane8 >= 6 * H) & (lane8 < 7 * H)))    # fwd-direction lanes
            lane2 = lax.broadcasted_iota(jnp.int32, (B, 2 * H), 1)
            left_half = lane2 < H                                   # fwd half of [h_f|h_b]

        def lstm_cell(gates, c_prev, g_mask, W):
            # gates: (B, 4W) f32, gate order i,f,g,o (each W lanes wide, bias included).
            # i/f/o pre-activations arrive pre-scaled by 0.5 (folded into the weights), so
            # a single tanh pass gives both tanh(g) and sigmoid(i,f,o) = 0.5*tanh(x/2)+0.5.
            th = jnp.tanh(gates)
            act = jnp.where(g_mask, th, 0.5 * th + 0.5)
            i_g = act[:, 0 * W:1 * W]
            f_g = act[:, 1 * W:2 * W]
            g_g = act[:, 2 * W:3 * W]
            o_g = act[:, 3 * W:4 * W]
            c_new = f_g * c_prev + i_g * g_g
            h_new = o_g * jnp.tanh(c_new)
            return h_new, c_new

        # ---- embedding lookup: bf16 one-hot @ bf16 table on the MXU (exact gather) ----
        # TODO(synk): switch to an index-driven gather / per-row DMA for realistic vocab
        # sizes; the one-hot path keeps the whole padded table VMEM-resident.
        lanes = lax.broadcasted_iota(jnp.int32, (T * B, V), 1)
        onehot = (lanes == ids_ref[...]).astype(jnp.float32).astype(jnp.bfloat16)
        x = jnp.dot(onehot, emb_ref[...],
                    preferred_element_type=jnp.float32).astype(jnp.bfloat16)   # (T*B, E)

        # ---- non-final layers: fused bidirectional recurrence ----
        for l in range(L - 1):
            wih_ref, whh_ref, b_ref = layer_refs[l]
            # Input projection for BOTH directions hoisted out of the recurrence.
            gx = jnp.dot(x, wih_ref[...],
                         preferred_element_type=jnp.float32) + b_ref[...]      # (T*B, 8H)
            whh = whh_ref[...]                                                  # (2H, 8H)
            h = jnp.zeros((B, 2 * H), jnp.float32)   # [h_f | h_b]
            c = jnp.zeros((B, 2 * H), jnp.float32)   # [c_f | c_b]
            hs = []
            for s in range(T):  # T static & small -> fully unrolled
                # fwd gates use x at time s, bwd gates use x at time T-1-s.
                g_fwd = gx[s * B:(s + 1) * B, :]
                g_bwd = gx[(T - 1 - s) * B:(T - s) * B, :]
                gates = jnp.where(fwd_cols, g_fwd, g_bwd)
                if s > 0:  # initial h is zero -> skip hidden matmul at s == 0
                    gates = gates + jnp.dot(h.astype(jnp.bfloat16), whh,
                                            preferred_element_type=jnp.float32)
                h, c = lstm_cell(gates, c, gmask_2dir, 2 * H)
                hs.append(h)
            # y[t] = [h_f(t) | h_b(t)]; h_f(t) sits in step t, h_b(t) in step T-1-t.
            y = jnp.concatenate(
                [jnp.where(left_half, hs[t], hs[T - 1 - t]) for t in range(T)], axis=0)
            x = y.astype(jnp.bfloat16)                                          # (T*B, 2H)

        # ---- final layer: forward chain + one backward step at t = T-1 ----
        wih_ref, whh_ref, b_ref = layer_refs[L - 1]
        gx = jnp.dot(x, wih_ref[...],
                     preferred_element_type=jnp.float32) + b_ref[...]   # (T*B, [fwd4H|bwd4H])
        whh_f = whh_ref[...]                                             # (H, 4H)
        h_f = jnp.zeros((B, H), jnp.float32)
        c_f = jnp.zeros((B, H), jnp.float32)
        for t in range(T):
            g = gx[t * B:(t + 1) * B, 0:G4]
            if t > 0:
                g = g + jnp.dot(h_f.astype(jnp.bfloat16), whh_f,
                                preferred_element_type=jnp.float32)
            h_f, c_f = lstm_cell(g, c_f, gmask_1dir, H)
        # Backward direction: only its first step (original t = T-1, zero initial state)
        # feeds output[:, -1, :]; zero h -> no hidden matmul needed.
        g_b = gx[(T - 1) * B:T * B, G4:2 * G4]
        h_b, _ = lstm_cell(g_b, jnp.zeros((B, H), jnp.float32), gmask_1dir, H)

        # ---- classifier on last_output = [h_f(T-1) | h_b(T-1)]; one MXU push ----
        # TODO(synk): dropout before the classifier is identity (eval/inference semantics).
        h_cat = jnp.concatenate([h_f, h_b], axis=1).astype(jnp.bfloat16)   # (B, 2H)
        out_ref[...] = (jnp.dot(h_cat, wcls_ref[...],
                                preferred_element_type=jnp.float32) + bcls_ref[...])

    return kernel


# ----------------------------- params & wrapper -----------------------------

def init_params(key, n_vocab, hidden_dim, embedding_dim, n_layers, feature_n,
                bidirectional=True):
    """Deterministic init mirroring the PyTorch module, pre-packed for the fused kernel."""
    # TODO(synk): only the bidirectional LSTM variant is implemented (model_type='rnn'
    # and bidirectional=False branches of the PyTorch module are not translated).
    assert bidirectional
    H = hidden_dim
    keys = iter(jax.random.split(key, 8 * n_layers + 8))

    emb = jax.random.normal(next(keys), (n_vocab, embedding_dim), jnp.float32) * 0.1
    emb = emb.at[0].set(0.0)                          # padding_idx = 0
    v_pad = ((n_vocab + 127) // 128) * 128            # lane-align the one-hot matmul
    emb_p = (jnp.zeros((v_pad, embedding_dim), jnp.float32)
             .at[:n_vocab].set(emb).astype(jnp.bfloat16))

    def half_ifo(a):
        # Fold the 0.5 pre-scale of the sigmoid identity sigmoid(x)=0.5*tanh(x/2)+0.5
        # into the i/f/o gate columns once, at init time (g columns untouched).
        s = (jnp.ones((4 * H,), jnp.float32)
             .at[0:2 * H].set(0.5).at[3 * H:4 * H].set(0.5))
        return a * s

    def interleave(a_f, a_b):
        # per-gate column interleave: [i_f i_b f_f f_b g_f g_b o_f o_b], each H wide
        parts = []
        for g in range(4):
            parts.append(a_f[:, g * H:(g + 1) * H])
            parts.append(a_b[:, g * H:(g + 1) * H])
        return jnp.concatenate(parts, axis=1)

    k = 1.0 / (hidden_dim ** 0.5)
    layers = []
    for layer in range(n_layers):
        in_dim = embedding_dim if layer == 0 else 2 * hidden_dim
        wihT, whhT, bias = [], [], []
        for _d in range(2):  # forward, backward
            w_ih = jax.random.uniform(next(keys), (4 * H, in_dim), jnp.float32, -k, k)
            w_hh = jax.random.uniform(next(keys), (4 * H, H), jnp.float32, -k, k)
            b_ih = jax.random.uniform(next(keys), (4 * H,), jnp.float32, -k, k)
            b_hh = jax.random.uniform(next(keys), (4 * H,), jnp.float32, -k, k)
            wihT.append(half_ifo(w_ih.T))          # (in, 4H)
            whhT.append(half_ifo(w_hh.T))          # (H, 4H)
            bias.append(half_ifo(b_ih + b_hh))     # (4H,)
        if layer == n_layers - 1:
            # Last layer: plain [fwd 4H | bwd 4H] columns; backward whh unused (the single
            # backward step starts from zero state), so only the forward whh is shipped.
            wih = jnp.concatenate(wihT, axis=1)                                # (in, 8H)
            whh = whhT[0]                                                      # (H, 4H)
            b = jnp.concatenate(bias)[None, :]                                 # (1, 8H)
        else:
            # Fused bidirectional layer: gate-interleaved columns, block-packed whh.
            wih = interleave(wihT[0], wihT[1])                                 # (in, 8H)
            whh = jnp.concatenate(
                [interleave(whhT[0], jnp.zeros_like(whhT[1])),
                 interleave(jnp.zeros_like(whhT[0]), whhT[1])], axis=0)        # (2H, 8H)
            b = interleave(bias[0][None, :], bias[1][None, :])                 # (1, 8H)
        layers.append(dict(wih=wih.astype(jnp.bfloat16),
                           whh=whh.astype(jnp.bfloat16),
                           b=b.astype(jnp.float32)))

    cls_in = 2 * hidden_dim
    kc = 1.0 / (cls_in ** 0.5)
    w_cls = jax.random.uniform(next(keys), (feature_n, cls_in), jnp.float32, -kc, kc)
    b_cls = jax.random.uniform(next(keys), (feature_n,), jnp.float32, -kc, kc)
    f_pad = ((feature_n + 127) // 128) * 128          # lane-align the final store
    wcls_t = (jnp.zeros((cls_in, f_pad), jnp.float32)
              .at[:, :feature_n].set(w_cls.T).astype(jnp.bfloat16))
    bcls = jnp.zeros((1, f_pad), jnp.float32).at[0, :feature_n].set(b_cls)
    return dict(emb=emb_p, layers=layers, wcls_t=wcls_t, bcls=bcls)


def sentence_classifier_forward(params, token_ids, feature_n):
    """Single fused pallas_call: embedding -> bi-LSTM stack -> last step -> classifier."""
    B, T = token_ids.shape
    H = params["layers"][-1]["whh"].shape[0]      # last-layer whh is (H, 4H)
    L = len(params["layers"])
    F_pad = params["wcls_t"].shape[1]

    # Pad batch to a full sublane (8) so hidden-state tiles use whole vregs / MXU passes.
    B_pad = ((B + 7) // 8) * 8
    ids = jnp.zeros((B_pad, T), jnp.int32).at[:B, :].set(token_ids.astype(jnp.int32))
    ids_tm = ids.T.reshape(T * B_pad, 1)          # time-major: row = t * B_pad + b

    kernel = _make_fused_kernel(B_pad, T, H, L)

    args = [ids_tm, params["emb"]]
    for lyr in params["layers"]:
        args += [lyr["wih"], lyr["whh"], lyr["b"]]
    args += [params["wcls_t"], params["bcls"]]

    # TODO(synk): for v7x scaling (2 TensorCores, 64 MiB VMEM) add a batch grid axis with
    # dimension_semantics=("parallel",) and block the activations; grid-less is fine here.
    logits = pl.pallas_call(
        kernel,
        out_shape=jax.ShapeDtypeStruct((B_pad, F_pad), jnp.float32),
        in_specs=[pl.BlockSpec(memory_space=pltpu.MemorySpace.VMEM)] * len(args),
        out_specs=pl.BlockSpec(memory_space=pltpu.MemorySpace.VMEM),
        compiler_params=pltpu.CompilerParams(vmem_limit_bytes=32 * 1024 * 1024),
    )(*args)
    return logits[:B, :feature_n]


# ----------------------------- main ----------------------------------------

if __name__ == "__main__":
    n_vocab = 50
    hidden_dim = 32
    embedding_dim = 16
    n_layers = 2
    feature_n = 4

    B, T = 2, 8

    key = jax.random.PRNGKey(0)
    k_params, k_tokens = jax.random.split(key)
    params = init_params(k_params, n_vocab, hidden_dim, embedding_dim,
                         n_layers, feature_n, bidirectional=True)
    token_ids = jax.random.randint(k_tokens, (B, T), 0, n_vocab, dtype=jnp.int32)

    fwd = jax.jit(sentence_classifier_forward, static_argnums=2)
    logits = fwd(params, token_ids, feature_n)
    logits = jax.block_until_ready(logits)
    assert logits.shape == (B, feature_n)
    assert logits.dtype == jnp.float32
    print("KERNEL_OK")
</pallas_src>

<mosaic_0001>
module attributes {stable_mosaic.version = 11 : i64} {
  func.func @kernel(%arg0: memref<64x1xi32, #tpu.memory_space<vmem>>, %arg1: memref<128x16xbf16, #tpu.memory_space<vmem>>, %arg2: memref<16x256xbf16, #tpu.memory_space<vmem>>, %arg3: memref<64x256xbf16, #tpu.memory_space<vmem>>, %arg4: memref<1x256xf32, #tpu.memory_space<vmem>>, %arg5: memref<64x256xbf16, #tpu.memory_space<vmem>>, %arg6: memref<32x128xbf16, #tpu.memory_space<vmem>>, %arg7: memref<1x256xf32, #tpu.memory_space<vmem>>, %arg8: memref<64x128xbf16, #tpu.memory_space<vmem>>, %arg9: memref<1x128xf32, #tpu.memory_space<vmem>>, %arg10: memref<8x128xf32, #tpu.memory_space<vmem>>) attributes {dimension_semantics = [], scalar_prefetch = 0 : i64, scratch_operands = 0 : i64, tpu.core_type = #tpu.core_type<tc>} {
    %0 = tpu.iota {dimensions = array<i32: 1>} : vector<8x128xi32>
    %c64_i32 = arith.constant 64 : i32
    %1 = vector.broadcast %c64_i32 : i32 to vector<8x128xi32>
    %2 = arith.cmpi sge, %0, %1 : vector<8x128xi32>
    %c96_i32 = arith.constant 96 : i32
    %3 = vector.broadcast %c96_i32 : i32 to vector<8x128xi32>
    %4 = arith.cmpi slt, %0, %3 : vector<8x128xi32>
    %5 = arith.andi %2, %4 : vector<8x128xi1>
    %6 = tpu.iota {dimensions = array<i32: 1>} : vector<8x256xi32>
    %c128_i32 = arith.constant 128 : i32
    %7 = vector.broadcast %c128_i32 : i32 to vector<8x256xi32>
    %8 = arith.cmpi sge, %6, %7 : vector<8x256xi32>
    %c192_i32 = arith.constant 192 : i32
    %9 = vector.broadcast %c192_i32 : i32 to vector<8x256xi32>
    %10 = arith.cmpi slt, %6, %9 : vector<8x256xi32>
    %11 = arith.andi %8, %10 : vector<8x256xi1>
    %c32_i32 = arith.constant 32 : i32
    %12 = vector.broadcast %c32_i32 : i32 to vector<8x256xi32>
    %13 = arith.cmpi slt, %6, %12 : vector<8x256xi32>
    %c64_i32_0 = arith.constant 64 : i32
    %14 = vector.broadcast %c64_i32_0 : i32 to vector<8x256xi32>
    %15 = arith.cmpi sge, %6, %14 : vector<8x256xi32>
    %c96_i32_1 = arith.constant 96 : i32
    %16 = vector.broadcast %c96_i32_1 : i32 to vector<8x256xi32>
    %17 = arith.cmpi slt, %6, %16 : vector<8x256xi32>
    %18 = arith.andi %15, %17 : vector<8x256xi1>
    %19 = arith.ori %13, %18 : vector<8x256xi1>
    %c128_i32_2 = arith.constant 128 : i32
    %20 = vector.broadcast %c128_i32_2 : i32 to vector<8x256xi32>
    %21 = arith.cmpi sge, %6, %20 : vector<8x256xi32>
    %c160_i32 = arith.constant 160 : i32
    %22 = vector.broadcast %c160_i32 : i32 to vector<8x256xi32>
    %23 = arith.cmpi slt, %6, %22 : vector<8x256xi32>
    %24 = arith.andi %21, %23 : vector<8x256xi1>
    %25 = arith.ori %19, %24 : vector<8x256xi1>
    %c192_i32_3 = arith.constant 192 : i32
    %26 = vector.broadcast %c192_i32_3 : i32 to vector<8x256xi32>
    %27 = arith.cmpi sge, %6, %26 : vector<8x256xi32>
    %c224_i32 = arith.constant 224 : i32
    %28 = vector.broadcast %c224_i32 : i32 to vector<8x256xi32>
    %29 = arith.cmpi slt, %6, %28 : vector<8x256xi32>
    %30 = arith.andi %27, %29 : vector<8x256xi1>
    %31 = arith.ori %25, %30 : vector<8x256xi1>
    %32 = tpu.iota {dimensions = array<i32: 1>} : vector<8x64xi32>
    %c32_i32_4 = arith.constant 32 : i32
    %33 = vector.broadcast %c32_i32_4 : i32 to vector<8x64xi32>
    %34 = arith.cmpi slt, %32, %33 : vector<8x64xi32>
    %35 = tpu.iota {dimensions = array<i32: 1>} : vector<64x128xi32>
    %c0 = arith.constant 0 : index
    %c0_5 = arith.constant 0 : index
    %36 = vector.load %arg0[%c0, %c0_5] : memref<64x1xi32, #tpu.memory_space<vmem>>, vector<64x1xi32>
    %37 = vector.broadcast %36 : vector<64x1xi32> to vector<64x128xi32>
    %38 = arith.cmpi eq, %35, %37 : vector<64x128xi32>
    %39 = arith.extui %38 : vector<64x128xi1> to vector<64x128xi32>
    %40 = arith.sitofp %39 : vector<64x128xi32> to vector<64x128xf32>
    %41 = arith.truncf %40 : vector<64x128xf32> to vector<64x128xbf16>
    %c0_6 = arith.constant 0 : index
    %c0_7 = arith.constant 0 : index
    %42 = vector.load %arg1[%c0_6, %c0_7] : memref<128x16xbf16, #tpu.memory_space<vmem>>, vector<128x16xbf16>
    %cst = arith.constant dense<0.000000e+00> : vector<64x16xf32>
    %43 = tpu.matmul %41, %42, %cst {dimension_numbers = #tpu.dot_dimension_numbers<[1], [0], [0], [1], [0, 0, 1, 1], [], []>} : vector<64x128xbf16>, vector<128x16xbf16>, vector<64x16xf32> -> vector<64x16xf32>
    %44 = arith.truncf %43 : vector<64x16xf32> to vector<64x16xbf16>
    %c0_8 = arith.constant 0 : index
    %c0_9 = arith.constant 0 : index
    %45 = vector.load %arg2[%c0_8, %c0_9] : memref<16x256xbf16, #tpu.memory_space<vmem>>, vector<16x256xbf16>
    %cst_10 = arith.constant dense<0.000000e+00> : vector<64x256xf32>
    %46 = tpu.matmul %44, %45, %cst_10 {dimension_numbers = #tpu.dot_dimension_numbers<[1], [0], [0], [1], [0, 0, 1, 1], [], []>} : vector<64x16xbf16>, vector<16x256xbf16>, vector<64x256xf32> -> vector<64x256xf32>
    %c0_11 = arith.constant 0 : index
    %c0_12 = arith.constant 0 : index
    %47 = vector.load %arg4[%c0_11, %c0_12] : memref<1x256xf32, #tpu.memory_space<vmem>>, vector<1x256xf32>
    %48 = vector.broadcast %47 : vector<1x256xf32> to vector<64x256xf32>
    %49 = arith.addf %46, %48 : vector<64x256xf32>
    %c0_13 = arith.constant 0 : index
    %c0_14 = arith.constant 0 : index
    %50 = vector.load %arg3[%c0_13, %c0_14] : memref<64x256xbf16, #tpu.memory_space<vmem>>, vector<64x256xbf16>
    %cst_15 = arith.constant 0.000000e+00 : f32
    %51 = vector.broadcast %cst_15 : f32 to vector<8x64xf32>
    %52 = vector.extract_strided_slice %49 {offsets = [0, 0], sizes = [8, 256], strides = [1, 1]} : vector<64x256xf32> to vector<8x256xf32>
    %53 = vector.extract_strided_slice %49 {offsets = [56, 0], sizes = [8, 256], strides = [1, 1]} : vector<64x256xf32> to vector<8x256xf32>
    %54 = arith.select %31, %52, %53 : vector<8x256xi1>, vector<8x256xf32>
    %55 = math.tanh %54 : vector<8x256xf32>
    %cst_16 = arith.constant 5.000000e-01 : f32
    %56 = vector.broadcast %cst_16 : f32 to vector<8x256xf32>
    %57 = arith.mulf %56, %55 : vector<8x256xf32>
    %cst_17 = arith.constant 5.000000e-01 : f32
    %58 = vector.broadcast %cst_17 : f32 to vector<8x256xf32>
    %59 = arith.addf %57, %58 : vector<8x256xf32>
    %60 = arith.select %11, %55, %59 : vector<8x256xi1>, vector<8x256xf32>
    %61 = vector.extract_strided_slice %60 {offsets = [0, 0], sizes = [8, 64], strides = [1, 1]} : vector<8x256xf32> to vector<8x64xf32>
    %62 = vector.extract_strided_slice %60 {offsets = [0, 64], sizes = [8, 64], strides = [1, 1]} : vector<8x256xf32> to vector<8x64xf32>
    %63 = vector.extract_strided_slice %60 {offsets = [0, 128], sizes = [8, 64], strides = [1, 1]} : vector<8x256xf32> to vector<8x64xf32>
    %64 = vector.extract_strided_slice %60 {offsets = [0, 192], sizes = [8, 64], strides = [1, 1]} : vector<8x256xf32> to vector<8x64xf32>
    %65 = arith.mulf %62, %51 : vector<8x64xf32>
    %66 = arith.mulf %61, %63 : vector<8x64xf32>
    %67 = arith.addf %65, %66 : vector<8x64xf32>
    %68 = math.tanh %67 : vector<8x64xf32>
    %69 = arith.mulf %64, %68 : vector<8x64xf32>
    %70 = vector.extract_strided_slice %49 {offsets = [8, 0], sizes = [8, 256], strides = [1, 1]} : vector<64x256xf32> to vector<8x256xf32>
    %71 = vector.extract_strided_slice %49 {offsets = [48, 0], sizes = [8, 256], strides = [1, 1]} : vector<64x256xf32> to vector<8x256xf32>
    %72 = arith.select %31, %70, %71 : vector<8x256xi1>, vector<8x256xf32>
    %73 = arith.truncf %69 : vector<8x64xf32> to vector<8x64xbf16>
    %cst_18 = arith.constant dense<0.000000e+00> : vector<8x256xf32>
    %74 = tpu.matmul %73, %50, %cst_18 {dimension_numbers = #tpu.dot_dimension_numbers<[1], [0], [0], [1], [0, 0, 1, 1], [], []>} : vector<8x64xbf16>, vector<64x256xbf16>, vector<8x256xf32> -> vector<8x256xf32>
    %75 = arith.addf %72, %74 : vector<8x256xf32>
    %76 = math.tanh %75 : vector<8x256xf32>
    %cst_19 = arith.constant 5.000000e-01 : f32
    %77 = vector.broadcast %cst_19 : f32 to vector<8x256xf32>
    %78 = arith.mulf %77, %76 : vector<8x256xf32>
    %cst_20 = arith.constant 5.000000e-01 : f32
    %79 = vector.broadcast %cst_20 : f32 to vector<8x256xf32>
    %80 = arith.addf %78, %79 : vector<8x256xf32>
    %81 = arith.select %11, %76, %80 : vector<8x256xi1>, vector<8x256xf32>
    %82 = vector.extract_strided_slice %81 {offsets = [0, 0], sizes = [8, 64], strides = [1, 1]} : vector<8x256xf32> to vector<8x64xf32>
    %83 = vector.extract_strided_slice %81 {offsets = [0, 64], sizes = [8, 64], strides = [1, 1]} : vector<8x256xf32> to vector<8x64xf32>
    %84 = vector.extract_strided_slice %81 {offsets = [0, 128], sizes = [8, 64], strides = [1, 1]} : vector<8x256xf32> to vector<8x64xf32>
    %85 = vector.extract_strided_slice %81 {offsets = [0, 192], sizes = [8, 64], strides = [1, 1]} : vector<8x256xf32> to vector<8x64xf32>
    %86 = arith.mulf %83, %67 : vector<8x64xf32>
    %87 = arith.mulf %82, %84 : vector<8x64xf32>
    %88 = arith.addf %86, %87 : vector<8x64xf32>
    %89 = math.tanh %88 : vector<8x64xf32>
    %90 = arith.mulf %85, %89 : vector<8x64xf32>
    %91 = vector.extract_strided_slice %49 {offsets = [16, 0], sizes = [8, 256], strides = [1, 1]} : vector<64x256xf32> to vector<8x256xf32>
    %92 = vector.extract_strided_slice %49 {offsets = [40, 0], sizes = [8, 256], strides = [1, 1]} : vector<64x256xf32> to vector<8x256xf32>
    %93 = arith.select %31, %91, %92 : vector<8x256xi1>, vector<8x256xf32>
    %94 = arith.truncf %90 : vector<8x64xf32> to vector<8x64xbf16>
    %cst_21 = arith.constant dense<0.000000e+00> : vector<8x256xf32>
    %95 = tpu.matmul %94, %50, %cst_21 {dimension_numbers = #tpu.dot_dimension_numbers<[1], [0], [0], [1], [0, 0, 1, 1], [], []>} : vector<8x64xbf16>, vector<64x256xbf16>, vector<8x256xf32> -> vector<8x256xf32>
    %96 = arith.addf %93, %95 : vector<8x256xf32>
    %97 = math.tanh %96 : vector<8x256xf32>
    %cst_22 = arith.constant 5.000000e-01 : f32
    %98 = vector.broadcast %cst_22 : f32 to vector<8x256xf32>
    %99 = arith.mulf %98, %97 : vector<8x256xf32>
    %cst_23 = arith.constant 5.000000e-01 : f32
    %100 = vector.broadcast %cst_23 : f32 to vector<8x256xf32>
    %101 = arith.addf %99, %100 : vector<8x256xf32>
    %102 = arith.select %11, %97, %101 : vector<8x256xi1>, vector<8x256xf32>
    %103 = vector.extract_strided_slice %102 {offsets = [0, 0], sizes = [8, 64], strides = [1, 1]} : vector<8x256xf32> to vector<8x64xf32>
    %104 = vector.extract_strided_slice %102 {offsets = [0, 64], sizes = [8, 64], strides = [1, 1]} : vector<8x256xf32> to vector<8x64xf32>
    %105 = vector.extract_strided_slice %102 {offsets = [0, 128], sizes = [8, 64], strides = [1, 1]} : vector<8x256xf32> to vector<8x64xf32>
    %106 = vector.extract_strided_slice %102 {offsets = [0, 192], sizes = [8, 64], strides = [1, 1]} : vector<8x256xf32> to vector<8x64xf32>
    %107 = arith.mulf %104, %88 : vector<8x64xf32>
    %108 = arith.mulf %103, %105 : vector<8x64xf32>
    %109 = arith.addf %107, %108 : vector<8x64xf32>
    %110 = math.tanh %109 : vector<8x64xf32>
    %111 = arith.mulf %106, %110 : vector<8x64xf32>
    %112 = vector.extract_strided_slice %49 {offsets = [24, 0], sizes = [8, 256], strides = [1, 1]} : vector<64x256xf32> to vector<8x256xf32>
    %113 = vector.extract_strided_slice %49 {offsets = [32, 0], sizes = [8, 256], strides = [1, 1]} : vector<64x256xf32> to vector<8x256xf32>
    %114 = arith.select %31, %112, %113 : vector<8x256xi1>, vector<8x256xf32>
    %115 = arith.truncf %111 : vector<8x64xf32> to vector<8x64xbf16>
    %cst_24 = arith.constant dense<0.000000e+00> : vector<8x256xf32>
    %116 = tpu.matmul %115, %50, %cst_24 {dimension_numbers = #tpu.dot_dimension_numbers<[1], [0], [0], [1], [0, 0, 1, 1], [], []>} : vector<8x64xbf16>, vector<64x256xbf16>, vector<8x256xf32> -> vector<8x256xf32>
    %117 = arith.addf %114, %116 : vector<8x256xf32>
    %118 = math.tanh %117 : vector<8x256xf32>
    %cst_25 = arith.constant 5.000000e-01 : f32
    %119 = vector.broadcast %cst_25 : f32 to vector<8x256xf32>
    %120 = arith.mulf %119, %118 : vector<8x256xf32>
    %cst_26 = arith.constant 5.000000e-01 : f32
    %121 = vector.broadcast %cst_26 : f32 to vector<8x256xf32>
    %122 = arith.addf %120, %121 : vector<8x256xf32>
    %123 = arith.select %11, %118, %122 : vector<8x256xi1>, vector<8x256xf32>
    %124 = vector.extract_strided_slice %123 {offsets = [0, 0], sizes = [8, 64], strides = [1, 1]} : vector<8x256xf32> to vector<8x64xf32>
    %125 = vector.extract_strided_slice %123 {offsets = [0, 64], sizes = [8, 64], strides = [1, 1]} : vector<8x256xf32> to vector<8x64xf32>
    %126 = vector.extract_strided_slice %123 {offsets = [0, 128], sizes = [8, 64], strides = [1, 1]} : vector<8x256xf32> to vector<8x64xf32>
    %127 = vector.extract_strided_slice %123 {offsets = [0, 192], sizes = [8, 64], strides = [1, 1]} : vector<8x256xf32> to vector<8x64xf32>
    %128 = arith.mulf %125, %109 : vector<8x64xf32>
    %129 = arith.mulf %124, %126 : vector<8x64xf32>
    %130 = arith.addf %128, %129 : vector<8x64xf32>
    %131 = math.tanh %130 : vector<8x64xf32>
    %132 = arith.mulf %127, %131 : vector<8x64xf32>
    %133 = vector.extract_strided_slice %49 {offsets = [32, 0], sizes = [8, 256], strides = [1, 1]} : vector<64x256xf32> to vector<8x256xf32>
    %134 = vector.extract_strided_slice %49 {offsets = [24, 0], sizes = [8, 256], strides = [1, 1]} : vector<64x256xf32> to vector<8x256xf32>
    %135 = arith.select %31, %133, %134 : vector<8x256xi1>, vector<8x256xf32>
    %136 = arith.truncf %132 : vector<8x64xf32> to vector<8x64xbf16>
    %cst_27 = arith.constant dense<0.000000e+00> : vector<8x256xf32>
    %137 = tpu.matmul %136, %50, %cst_27 {dimension_numbers = #tpu.dot_dimension_numbers<[1], [0], [0], [1], [0, 0, 1, 1], [], []>} : vector<8x64xbf16>, vector<64x256xbf16>, vector<8x256xf32> -> vector<8x256xf32>
    %138 = arith.addf %135, %137 : vector<8x256xf32>
    %139 = math.tanh %138 : vector<8x256xf32>
    %cst_28 = arith.constant 5.000000e-01 : f32
    %140 = vector.broadcast %cst_28 : f32 to vector<8x256xf32>
    %141 = arith.mulf %140, %139 : vector<8x256xf32>
    %cst_29 = arith.constant 5.000000e-01 : f32
    %142 = vector.broadcast %cst_29 : f32 to vector<8x256xf32>
    %143 = arith.addf %141, %142 : vector<8x256xf32>
    %144 = arith.select %11, %139, %143 : vector<8x256xi1>, vector<8x256xf32>
    %145 = vector.extract_strided_slice %144 {offsets = [0, 0], sizes = [8, 64], strides = [1, 1]} : vector<8x256xf32> to vector<8x64xf32>
    %146 = vector.extract_strided_slice %144 {offsets = [0, 64], sizes = [8, 64], strides = [1, 1]} : vector<8x256xf32> to vector<8x64xf32>
    %147 = vector.extract_strided_slice %144 {offsets = [0, 128], sizes = [8, 64], strides = [1, 1]} : vector<8x256xf32> to vector<8x64xf32>
    %148 = vector.extract_strided_slice %144 {offsets = [0, 192], sizes = [8, 64], strides = [1, 1]} : vector<8x256xf32> to vector<8x64xf32>
    %149 = arith.mulf %146, %130 : vector<8x64xf32>
    %150 = arith.mulf %145, %147 : vector<8x64xf32>
    %151 = arith.addf %149, %150 : vector<8x64xf32>
    %152 = math.tanh %151 : vector<8x64xf32>
    %153 = arith.mulf %148, %152 : vector<8x64xf32>
    %154 = vector.extract_strided_slice %49 {offsets = [40, 0], sizes = [8, 256], strides = [1, 1]} : vector<64x256xf32> to vector<8x256xf32>
    %155 = vector.extract_strided_slice %49 {offsets = [16, 0], sizes = [8, 256], strides = [1, 1]} : vector<64x256xf32> to vector<8x256xf32>
    %156 = arith.select %31, %154, %155 : vector<8x256xi1>, vector<8x256xf32>
    %157 = arith.truncf %153 : vector<8x64xf32> to vector<8x64xbf16>
    %cst_30 = arith.constant dense<0.000000e+00> : vector<8x256xf32>
    %158 = tpu.matmul %157, %50, %cst_30 {dimension_numbers = #tpu.dot_dimension_numbers<[1], [0], [0], [1], [0, 0, 1, 1], [], []>} : vector<8x64xbf16>, vector<64x256xbf16>, vector<8x256xf32> -> vector<8x256xf32>
    %159 = arith.addf %156, %158 : vector<8x256xf32>
    %160 = math.tanh %159 : vector<8x256xf32>
    %cst_31 = arith.constant 5.000000e-01 : f32
    %161 = vector.broadcast %cst_31 : f32 to vector<8x256xf32>
    %162 = arith.mulf %161, %160 : vector<8x256xf32>
    %cst_32 = arith.constant 5.000000e-01 : f32
    %163 = vector.broadcast %cst_32 : f32 to vector<8x256xf32>
    %164 = arith.addf %162, %163 : vector<8x256xf32>
    %165 = arith.select %11, %160, %164 : vector<8x256xi1>, vector<8x256xf32>
    %166 = vector.extract_strided_slice %165 {offsets = [0, 0], sizes = [8, 64], strides = [1, 1]} : vector<8x256xf32> to vector<8x64xf32>
    %167 = vector.extract_strided_slice %165 {offsets = [0, 64], sizes = [8, 64], strides = [1, 1]} : vector<8x256xf32> to vector<8x64xf32>
    %168 = vector.extract_strided_slice %165 {offsets = [0, 128], sizes = [8, 64], strides = [1, 1]} : vector<8x256xf32> to vector<8x64xf32>
    %169 = vector.extract_strided_slice %165 {offsets = [0, 192], sizes = [8, 64], strides = [1, 1]} : vector<8x256xf32> to vector<8x64xf32>
    %170 = arith.mulf %167, %151 : vector<8x64xf32>
    %171 = arith.mulf %166, %168 : vector<8x64xf32>
    %172 = arith.addf %170, %171 : vector<8x64xf32>
    %173 = math.tanh %172 : vector<8x64xf32>
    %174 = arith.mulf %169, %173 : vector<8x64xf32>
    %175 = vector.extract_strided_slice %49 {offsets = [48, 0], sizes = [8, 256], strides = [1, 1]} : vector<64x256xf32> to vector<8x256xf32>
    %176 = vector.extract_strided_slice %49 {offsets = [8, 0], sizes = [8, 256], strides = [1, 1]} : vector<64x256xf32> to vector<8x256xf32>
    %177 = arith.select %31, %175, %176 : vector<8x256xi1>, vector<8x256xf32>
    %178 = arith.truncf %174 : vector<8x64xf32> to vector<8x64xbf16>
    %cst_33 = arith.constant dense<0.000000e+00> : vector<8x256xf32>
    %179 = tpu.matmul %178, %50, %cst_33 {dimension_numbers = #tpu.dot_dimension_numbers<[1], [0], [0], [1], [0, 0, 1, 1], [], []>} : vector<8x64xbf16>, vector<64x256xbf16>, vector<8x256xf32> -> vector<8x256xf32>
    %180 = arith.addf %177, %179 : vector<8x256xf32>
    %181 = math.tanh %180 : vector<8x256xf32>
    %cst_34 = arith.constant 5.000000e-01 : f32
    %182 = vector.broadcast %cst_34 : f32 to vector<8x256xf32>
    %183 = arith.mulf %182, %181 : vector<8x256xf32>
    %cst_35 = arith.constant 5.000000e-01 : f32
    %184 = vector.broadcast %cst_35 : f32 to vector<8x256xf32>
    %185 = arith.addf %183, %184 : vector<8x256xf32>
    %186 = arith.select %11, %181, %185 : vector<8x256xi1>, vector<8x256xf32>
    %187 = vector.extract_strided_slice %186 {offsets = [0, 0], sizes = [8, 64], strides = [1, 1]} : vector<8x256xf32> to vector<8x64xf32>
    %188 = vector.extract_strided_slice %186 {offsets = [0, 64], sizes = [8, 64], strides = [1, 1]} : vector<8x256xf32> to vector<8x64xf32>
    %189 = vector.extract_strided_slice %186 {offsets = [0, 128], sizes = [8, 64], strides = [1, 1]} : vector<8x256xf32> to vector<8x64xf32>
    %190 = vector.extract_strided_slice %186 {offsets = [0, 192], sizes = [8, 64], strides = [1, 1]} : vector<8x256xf32> to vector<8x64xf32>
    %191 = arith.mulf %188, %172 : vector<8x64xf32>
    %192 = arith.mulf %187, %189 : vector<8x64xf32>
    %193 = arith.addf %191, %192 : vector<8x64xf32>
    %194 = math.tanh %193 : vector<8x64xf32>
    %195 = arith.mulf %190, %194 : vector<8x64xf32>
    %196 = vector.extract_strided_slice %49 {offsets = [56, 0], sizes = [8, 256], strides = [1, 1]} : vector<64x256xf32> to vector<8x256xf32>
    %197 = vector.extract_strided_slice %49 {offsets = [0, 0], sizes = [8, 256], strides = [1, 1]} : vector<64x256xf32> to vector<8x256xf32>
    %198 = arith.select %31, %196, %197 : vector<8x256xi1>, vector<8x256xf32>
    %199 = arith.truncf %195 : vector<8x64xf32> to vector<8x64xbf16>
    %cst_36 = arith.constant dense<0.000000e+00> : vector<8x256xf32>
    %200 = tpu.matmul %199, %50, %cst_36 {dimension_numbers = #tpu.dot_dimension_numbers<[1], [0], [0], [1], [0, 0, 1, 1], [], []>} : vector<8x64xbf16>, vector<64x256xbf16>, vector<8x256xf32> -> vector<8x256xf32>
    %201 = arith.addf %198, %200 : vector<8x256xf32>
    %202 = math.tanh %201 : vector<8x256xf32>
    %cst_37 = arith.constant 5.000000e-01 : f32
    %203 = vector.broadcast %cst_37 : f32 to vector<8x256xf32>
    %204 = arith.mulf %203, %202 : vector<8x256xf32>
    %cst_38 = arith.constant 5.000000e-01 : f32
    %205 = vector.broadcast %cst_38 : f32 to vector<8x256xf32>
    %206 = arith.addf %204, %205 : vector<8x256xf32>
    %207 = arith.select %11, %202, %206 : vector<8x256xi1>, vector<8x256xf32>
    %208 = vector.extract_strided_slice %207 {offsets = [0, 0], sizes = [8, 64], strides = [1, 1]} : vector<8x256xf32> to vector<8x64xf32>
    %209 = vector.extract_strided_slice %207 {offsets = [0, 64], sizes = [8, 64], strides = [1, 1]} : vector<8x256xf32> to vector<8x64xf32>
    %210 = vector.extract_strided_slice %207 {offsets = [0, 128], sizes = [8, 64], strides = [1, 1]} : vector<8x256xf32> to vector<8x64xf32>
    %211 = vector.extract_strided_slice %207 {offsets = [0, 192], sizes = [8, 64], strides = [1, 1]} : vector<8x256xf32> to vector<8x64xf32>
    %212 = arith.mulf %209, %193 : vector<8x64xf32>
    %213 = arith.mulf %208, %210 : vector<8x64xf32>
    %214 = arith.addf %212, %213 : vector<8x64xf32>
    %215 = math.tanh %214 : vector<8x64xf32>
    %216 = arith.mulf %211, %215 : vector<8x64xf32>
    %217 = arith.select %34, %69, %216 : vector<8x64xi1>, vector<8x64xf32>
    %218 = arith.select %34, %90, %195 : vector<8x64xi1>, vector<8x64xf32>
    %219 = arith.select %34, %111, %174 : vector<8x64xi1>, vector<8x64xf32>
    %220 = arith.select %34, %132, %153 : vector<8x64xi1>, vector<8x64xf32>
    %221 = arith.select %34, %153, %132 : vector<8x64xi1>, vector<8x64xf32>
    %222 = arith.select %34, %174, %111 : vector<8x64xi1>, vector<8x64xf32>
    %223 = arith.select %34, %195, %90 : vector<8x64xi1>, vector<8x64xf32>
    %224 = arith.select %34, %216, %69 : vector<8x64xi1>, vector<8x64xf32>
    %225 = tpu.concatenate %217, %218, %219, %220, %221, %222, %223, %224 in 0 : vector<8x64xf32>, vector<8x64xf32>, vector<8x64xf32>, vector<8x64xf32>, vector<8x64xf32>, vector<8x64xf32>, vector<8x64xf32>, vector<8x64xf32> -> vector<64x64xf32>
    %226 = arith.truncf %225 : vector<64x64xf32> to vector<64x64xbf16>
    %c0_39 = arith.constant 0 : index
    %c0_40 = arith.constant 0 : index
    %227 = vector.load %arg5[%c0_39, %c0_40] : memref<64x256xbf16, #tpu.memory_space<vmem>>, vector<64x256xbf16>
    %cst_41 = arith.constant dense<0.000000e+00> : vector<64x256xf32>
    %228 = tpu.matmul %226, %227, %cst_41 {dimension_numbers = #tpu.dot_dimension_numbers<[1], [0], [0], [1], [0, 0, 1, 1], [], []>} : vector<64x64xbf16>, vector<64x256xbf16>, vector<64x256xf32> -> vector<64x256xf32>
    %c0_42 = arith.constant 0 : index
    %c0_43 = arith.constant 0 : index
    %229 = vector.load %arg7[%c0_42, %c0_43] : memref<1x256xf32, #tpu.memory_space<vmem>>, vector<1x256xf32>
    %230 = vector.broadcast %229 : vector<1x256xf32> to vector<64x256xf32>
    %231 = arith.addf %228, %230 : vector<64x256xf32>
    %c0_44 = arith.constant 0 : index
    %c0_45 = arith.constant 0 : index
    %232 = vector.load %arg6[%c0_44, %c0_45] : memref<32x128xbf16, #tpu.memory_space<vmem>>, vector<32x128xbf16>
    %cst_46 = arith.constant 0.000000e+00 : f32
    %233 = vector.broadcast %cst_46 : f32 to vector<8x32xf32>
    %234 = vector.extract_strided_slice %231 {offsets = [0, 0], sizes = [8, 128], strides = [1, 1]} : vector<64x256xf32> to vector<8x128xf32>
    %235 = math.tanh %234 : vector<8x128xf32>
    %cst_47 = arith.constant 5.000000e-01 : f32
    %236 = vector.broadcast %cst_47 : f32 to vector<8x128xf32>
    %237 = arith.mulf %236, %235 : vector<8x128xf32>
    %cst_48 = arith.constant 5.000000e-01 : f32
    %238 = vector.broadcast %cst_48 : f32 to vector<8x128xf32>
    %239 = arith.addf %237, %238 : vector<8x128xf32>
    %240 = arith.select %5, %235, %239 : vector<8x128xi1>, vector<8x128xf32>
    %241 = vector.extract_strided_slice %240 {offsets = [0, 0], sizes = [8, 32], strides = [1, 1]} : vector<8x128xf32> to vector<8x32xf32>
    %242 = vector.extract_strided_slice %240 {offsets = [0, 32], sizes = [8, 32], strides = [1, 1]} : vector<8x128xf32> to vector<8x32xf32>
    %243 = vector.extract_strided_slice %240 {offsets = [0, 64], sizes = [8, 32], strides = [1, 1]} : vector<8x128xf32> to vector<8x32xf32>
    %244 = vector.extract_strided_slice %240 {offsets = [0, 96], sizes = [8, 32], strides = [1, 1]} : vector<8x128xf32> to vector<8x32xf32>
    %245 = arith.mulf %242, %233 : vector<8x32xf32>
    %246 = arith.mulf %241, %243 : vector<8x32xf32>
    %247 = arith.addf %245, %246 : vector<8x32xf32>
    %248 = math.tanh %247 : vector<8x32xf32>
    %249 = arith.mulf %244, %248 : vector<8x32xf32>
    %250 = vector.extract_strided_slice %231 {offsets = [8, 0], sizes = [8, 128], strides = [1, 1]} : vector<64x256xf32> to vector<8x128xf32>
    %251 = arith.truncf %249 : vector<8x32xf32> to vector<8x32xbf16>
    %cst_49 = arith.constant dense<0.000000e+00> : vector<8x128xf32>
    %252 = tpu.matmul %251, %232, %cst_49 {dimension_numbers = #tpu.dot_dimension_numbers<[1], [0], [0], [1], [0, 0, 1, 1], [], []>} : vector<8x32xbf16>, vector<32x128xbf16>, vector<8x128xf32> -> vector<8x128xf32>
    %253 = arith.addf %250, %252 : vector<8x128xf32>
    %254 = math.tanh %253 : vector<8x128xf32>
    %cst_50 = arith.constant 5.000000e-01 : f32
    %255 = vector.broadcast %cst_50 : f32 to vector<8x128xf32>
    %256 = arith.mulf %255, %254 : vector<8x128xf32>
    %cst_51 = arith.constant 5.000000e-01 : f32
    %257 = vector.broadcast %cst_51 : f32 to vector<8x128xf32>
    %258 = arith.addf %256, %257 : vector<8x128xf32>
    %259 = arith.select %5, %254, %258 : vector<8x128xi1>, vector<8x128xf32>
    %260 = vector.extract_strided_slice %259 {offsets = [0, 0], sizes = [8, 32], strides = [1, 1]} : vector<8x128xf32> to vector<8x32xf32>
    %261 = vector.extract_strided_slice %259 {offsets = [0, 32], sizes = [8, 32], strides = [1, 1]} : vector<8x128xf32> to vector<8x32xf32>
    %262 = vector.extract_strided_slice %259 {offsets = [0, 64], sizes = [8, 32], strides = [1, 1]} : vector<8x128xf32> to vector<8x32xf32>
    %263 = vector.extract_strided_slice %259 {offsets = [0, 96], sizes = [8, 32], strides = [1, 1]} : vector<8x128xf32> to vector<8x32xf32>
    %264 = arith.mulf %261, %247 : vector<8x32xf32>
    %265 = arith.mulf %260, %262 : vector<8x32xf32>
    %266 = arith.addf %264, %265 : vector<8x32xf32>
    %267 = math.tanh %266 : vector<8x32xf32>
    %268 = arith.mulf %263, %267 : vector<8x32xf32>
    %269 = vector.extract_strided_slice %231 {offsets = [16, 0], sizes = [8, 128], strides = [1, 1]} : vector<64x256xf32> to vector<8x128xf32>
    %270 = arith.truncf %268 : vector<8x32xf32> to vector<8x32xbf16>
    %cst_52 = arith.constant dense<0.000000e+00> : vector<8x128xf32>
    %271 = tpu.matmul %270, %232, %cst_52 {dimension_numbers = #tpu.dot_dimension_numbers<[1], [0], [0], [1], [0, 0, 1, 1], [], []>} : vector<8x32xbf16>, vector<32x128xbf16>, vector<8x128xf32> -> vector<8x128xf32>
    %272 = arith.addf %269, %271 : vector<8x128xf32>
    %273 = math.tanh %272 : vector<8x128xf32>
    %cst_53 = arith.constant 5.000000e-01 : f32
    %274 = vector.broadcast %cst_53 : f32 to vector<8x128xf32>
    %275 = arith.mulf %274, %273 : vector<8x128xf32>
    %cst_54 = arith.constant 5.000000e-01 : f32
    %276 = vector.broadcast %cst_54 : f32 to vector<8x128xf32>
    %277 = arith.addf %275, %276 : vector<8x128xf32>
    %278 = arith.select %5, %273, %277 : vector<8x128xi1>, vector<8x128xf32>
    %279 = vector.extract_strided_slice %278 {offsets = [0, 0], sizes = [8, 32], strides = [1, 1]} : vector<8x128xf32> to vector<8x32xf32>
    %280 = vector.extract_strided_slice %278 {offsets = [0, 32], sizes = [8, 32], strides = [1, 1]} : vector<8x128xf32> to vector<8x32xf32>
    %281 = vector.extract_strided_slice %278 {offsets = [0, 64], sizes = [8, 32], strides = [1, 1]} : vector<8x128xf32> to vector<8x32xf32>
    %282 = vector.extract_strided_slice %278 {offsets = [0, 96], sizes = [8, 32], strides = [1, 1]} : vector<8x128xf32> to vector<8x32xf32>
    %283 = arith.mulf %280, %266 : vector<8x32xf32>
    %284 = arith.mulf %279, %281 : vector<8x32xf32>
    %285 = arith.addf %283, %284 : vector<8x32xf32>
    %286 = math.tanh %285 : vector<8x32xf32>
    %287 = arith.mulf %282, %286 : vector<8x32xf32>
    %288 = vector.extract_strided_slice %231 {offsets = [24, 0], sizes = [8, 128], strides = [1, 1]} : vector<64x256xf32> to vector<8x128xf32>
    %289 = arith.truncf %287 : vector<8x32xf32> to vector<8x32xbf16>
    %cst_55 = arith.constant dense<0.000000e+00> : vector<8x128xf32>
    %290 = tpu.matmul %289, %232, %cst_55 {dimension_numbers = #tpu.dot_dimension_numbers<[1], [0], [0], [1], [0, 0, 1, 1], [], []>} : vector<8x32xbf16>, vector<32x128xbf16>, vector<8x128xf32> -> vector<8x128xf32>
    %291 = arith.addf %288, %290 : vector<8x128xf32>
    %292 = math.tanh %291 : vector<8x128xf32>
    %cst_56 = arith.constant 5.000000e-01 : f32
    %293 = vector.broadcast %cst_56 : f32 to vector<8x128xf32>
    %294 = arith.mulf %293, %292 : vector<8x128xf32>
    %cst_57 = arith.constant 5.000000e-01 : f32
    %295 = vector.broadcast %cst_57 : f32 to vector<8x128xf32>
    %296 = arith.addf %294, %295 : vector<8x128xf32>
    %297 = arith.select %5, %292, %296 : vector<8x128xi1>, vector<8x128xf32>
    %298 = vector.extract_strided_slice %297 {offsets = [0, 0], sizes = [8, 32], strides = [1, 1]} : vector<8x128xf32> to vector<8x32xf32>
    %299 = vector.extract_strided_slice %297 {offsets = [0, 32], sizes = [8, 32], strides = [1, 1]} : vector<8x128xf32> to vector<8x32xf32>
    %300 = vector.extract_strided_slice %297 {offsets = [0, 64], sizes = [8, 32], strides = [1, 1]} : vector<8x128xf32> to vector<8x32xf32>
    %301 = vector.extract_strided_slice %297 {offsets = [0, 96], sizes = [8, 32], strides = [1, 1]} : vector<8x128xf32> to vector<8x32xf32>
    %302 = arith.mulf %299, %285 : vector<8x32xf32>
    %303 = arith.mulf %298, %300 : vector<8x32xf32>
    %304 = arith.addf %302, %303 : vector<8x32xf32>
    %305 = math.tanh %304 : vector<8x32xf32>
    %306 = arith.mulf %301, %305 : vector<8x32xf32>
    %307 = vector.extract_strided_slice %231 {offsets = [32, 0], sizes = [8, 128], strides = [1, 1]} : vector<64x256xf32> to vector<8x128xf32>
    %308 = arith.truncf %306 : vector<8x32xf32> to vector<8x32xbf16>
    %cst_58 = arith.constant dense<0.000000e+00> : vector<8x128xf32>
    %309 = tpu.matmul %308, %232, %cst_58 {dimension_numbers = #tpu.dot_dimension_numbers<[1], [0], [0], [1], [0, 0, 1, 1], [], []>} : vector<8x32xbf16>, vector<32x128xbf16>, vector<8x128xf32> -> vector<8x128xf32>
    %310 = arith.addf %307, %309 : vector<8x128xf32>
    %311 = math.tanh %310 : vector<8x128xf32>
    %cst_59 = arith.constant 5.000000e-01 : f32
    %312 = vector.broadcast %cst_59 : f32 to vector<8x128xf32>
    %313 = arith.mulf %312, %311 : vector<8x128xf32>
    %cst_60 = arith.constant 5.000000e-01 : f32
    %314 = vector.broadcast %cst_60 : f32 to vector<8x128xf32>
    %315 = arith.addf %313, %314 : vector<8x128xf32>
    %316 = arith.select %5, %311, %315 : vector<8x128xi1>, vector<8x128xf32>
    %317 = vector.extract_strided_slice %316 {offsets = [0, 0], sizes = [8, 32], strides = [1, 1]} : vector<8x128xf32> to vector<8x32xf32>
    %318 = vector.extract_strided_slice %316 {offsets = [0, 32], sizes = [8, 32], strides = [1, 1]} : vector<8x128xf32> to vector<8x32xf32>
    %319 = vector.extract_strided_slice %316 {offsets = [0, 64], sizes = [8, 32], strides = [1, 1]} : vector<8x128xf32> to vector<8x32xf32>
    %320 = vector.extract_strided_slice %316 {offsets = [0, 96], sizes = [8, 32], strides = [1, 1]} : vector<8x128xf32> to vector<8x32xf32>
    %321 = arith.mulf %318, %304 : vector<8x32xf32>
    %322 = arith.mulf %317, %319 : vector<8x32xf32>
    %323 = arith.addf %321, %322 : vector<8x32xf32>
    %324 = math.tanh %323 : vector<8x32xf32>
    %325 = arith.mulf %320, %324 : vector<8x32xf32>
    %326 = vector.extract_strided_slice %231 {offsets = [40, 0], sizes = [8, 128], strides = [1, 1]} : vector<64x256xf32> to vector<8x128xf32>
    %327 = arith.truncf %325 : vector<8x32xf32> to vector<8x32xbf16>
    %cst_61 = arith.constant dense<0.000000e+00> : vector<8x128xf32>
    %328 = tpu.matmul %327, %232, %cst_61 {dimension_numbers = #tpu.dot_dimension_numbers<[1], [0], [0], [1], [0, 0, 1, 1], [], []>} : vector<8x32xbf16>, vector<32x128xbf16>, vector<8x128xf32> -> vector<8x128xf32>
    %329 = arith.addf %326, %328 : vector<8x128xf32>
    %330 = math.tanh %329 : vector<8x128xf32>
    %cst_62 = arith.constant 5.000000e-01 : f32
    %331 = vector.broadcast %cst_62 : f32 to vector<8x128xf32>
    %332 = arith.mulf %331, %330 : vector<8x128xf32>
    %cst_63 = arith.constant 5.000000e-01 : f32
    %333 = vector.broadcast %cst_63 : f32 to vector<8x128xf32>
    %334 = arith.addf %332, %333 : vector<8x128xf32>
    %335 = arith.select %5, %330, %334 : vector<8x128xi1>, vector<8x128xf32>
    %336 = vector.extract_strided_slice %335 {offsets = [0, 0], sizes = [8, 32], strides = [1, 1]} : vector<8x128xf32> to vector<8x32xf32>
    %337 = vector.extract_strided_slice %335 {offsets = [0, 32], sizes = [8, 32], strides = [1, 1]} : vector<8x128xf32> to vector<8x32xf32>
    %338 = vector.extract_strided_slice %335 {offsets = [0, 64], sizes = [8, 32], strides = [1, 1]} : vector<8x128xf32> to vector<8x32xf32>
    %339 = vector.extract_strided_slice %335 {offsets = [0, 96], sizes = [8, 32], strides = [1, 1]} : vector<8x128xf32> to vector<8x32xf32>
    %340 = arith.mulf %337, %323 : vector<8x32xf32>
    %341 = arith.mulf %336, %338 : vector<8x32xf32>
    %342 = arith.addf %340, %341 : vector<8x32xf32>
    %343 = math.tanh %342 : vector<8x32xf32>
    %344 = arith.mulf %339, %343 : vector<8x32xf32>
    %345 = vector.extract_strided_slice %231 {offsets = [48, 0], sizes = [8, 128], strides = [1, 1]} : vector<64x256xf32> to vector<8x128xf32>
    %346 = arith.truncf %344 : vector<8x32xf32> to vector<8x32xbf16>
    %cst_64 = arith.constant dense<0.000000e+00> : vector<8x128xf32>
    %347 = tpu.matmul %346, %232, %cst_64 {dimension_numbers = #tpu.dot_dimension_numbers<[1], [0], [0], [1], [0, 0, 1, 1], [], []>} : vector<8x32xbf16>, vector<32x128xbf16>, vector<8x128xf32> -> vector<8x128xf32>
    %348 = arith.addf %345, %347 : vector<8x128xf32>
    %349 = math.tanh %348 : vector<8x128xf32>
    %cst_65 = arith.constant 5.000000e-01 : f32
    %350 = vector.broadcast %cst_65 : f32 to vector<8x128xf32>
    %351 = arith.mulf %350, %349 : vector<8x128xf32>
    %cst_66 = arith.constant 5.000000e-01 : f32
    %352 = vector.broadcast %cst_66 : f32 to vector<8x128xf32>
    %353 = arith.addf %351, %352 : vector<8x128xf32>
    %354 = arith.select %5, %349, %353 : vector<8x128xi1>, vector<8x128xf32>
    %355 = vector.extract_strided_slice %354 {offsets = [0, 0], sizes = [8, 32], strides = [1, 1]} : vector<8x128xf32> to vector<8x32xf32>
    %356 = vector.extract_strided_slice %354 {offsets = [0, 32], sizes = [8, 32], strides = [1, 1]} : vector<8x128xf32> to vector<8x32xf32>
    %357 = vector.extract_strided_slice %354 {offsets = [0, 64], sizes = [8, 32], strides = [1, 1]} : vector<8x128xf32> to vector<8x32xf32>
    %358 = vector.extract_strided_slice %354 {offsets = [0, 96], sizes = [8, 32], strides = [1, 1]} : vector<8x128xf32> to vector<8x32xf32>
    %359 = arith.mulf %356, %342 : vector<8x32xf32>
    %360 = arith.mulf %355, %357 : vector<8x32xf32>
    %361 = arith.addf %359, %360 : vector<8x32xf32>
    %362 = math.tanh %361 : vector<8x32xf32>
    %363 = arith.mulf %358, %362 : vector<8x32xf32>
    %364 = vector.extract_strided_slice %231 {offsets = [56, 0], sizes = [8, 128], strides = [1, 1]} : vector<64x256xf32> to vector<8x128xf32>
    %365 = arith.truncf %363 : vector<8x32xf32> to vector<8x32xbf16>
    %cst_67 = arith.constant dense<0.000000e+00> : vector<8x128xf32>
    %366 = tpu.matmul %365, %232, %cst_67 {dimension_numbers = #tpu.dot_dimension_numbers<[1], [0], [0], [1], [0, 0, 1, 1], [], []>} : vector<8x32xbf16>, vector<32x128xbf16>, vector<8x128xf32> -> vector<8x128xf32>
    %367 = arith.addf %364, %366 : vector<8x128xf32>
    %368 = math.tanh %367 : vector<8x128xf32>
    %cst_68 = arith.constant 5.000000e-01 : f32
    %369 = vector.broadcast %cst_68 : f32 to vector<8x128xf32>
    %370 = arith.mulf %369, %368 : vector<8x128xf32>
    %cst_69 = arith.constant 5.000000e-01 : f32
    %371 = vector.broadcast %cst_69 : f32 to vector<8x128xf32>
    %372 = arith.addf %370, %371 : vector<8x128xf32>
    %373 = arith.select %5, %368, %372 : vector<8x128xi1>, vector<8x128xf32>
    %374 = vector.extract_strided_slice %373 {offsets = [0, 0], sizes = [8, 32], strides = [1, 1]} : vector<8x128xf32> to vector<8x32xf32>
    %375 = vector.extract_strided_slice %373 {offsets = [0, 32], sizes = [8, 32], strides = [1, 1]} : vector<8x128xf32> to vector<8x32xf32>
    %376 = vector.extract_strided_slice %373 {offsets = [0, 64], sizes = [8, 32], strides = [1, 1]} : vector<8x128xf32> to vector<8x32xf32>
    %377 = vector.extract_strided_slice %373 {offsets = [0, 96], sizes = [8, 32], strides = [1, 1]} : vector<8x128xf32> to vector<8x32xf32>
    %378 = arith.mulf %375, %361 : vector<8x32xf32>
    %379 = arith.mulf %374, %376 : vector<8x32xf32>
    %380 = arith.addf %378, %379 : vector<8x32xf32>
    %381 = math.tanh %380 : vector<8x32xf32>
    %382 = arith.mulf %377, %381 : vector<8x32xf32>
    %383 = vector.extract_strided_slice %231 {offsets = [56, 128], sizes = [8, 128], strides = [1, 1]} : vector<64x256xf32> to vector<8x128xf32>
    %cst_70 = arith.constant 0.000000e+00 : f32
    %384 = vector.broadcast %cst_70 : f32 to vector<8x32xf32>
    %385 = math.tanh %383 : vector<8x128xf32>
    %cst_71 = arith.constant 5.000000e-01 : f32
    %386 = vector.broadcast %cst_71 : f32 to vector<8x128xf32>
    %387 = arith.mulf %386, %385 : vector<8x128xf32>
    %cst_72 = arith.constant 5.000000e-01 : f32
    %388 = vector.broadcast %cst_72 : f32 to vector<8x128xf32>
    %389 = arith.addf %387, %388 : vector<8x128xf32>
    %390 = arith.select %5, %385, %389 : vector<8x128xi1>, vector<8x128xf32>
    %391 = vector.extract_strided_slice %390 {offsets = [0, 0], sizes = [8, 32], strides = [1, 1]} : vector<8x128xf32> to vector<8x32xf32>
    %392 = vector.extract_strided_slice %390 {offsets = [0, 32], sizes = [8, 32], strides = [1, 1]} : vector<8x128xf32> to vector<8x32xf32>
    %393 = vector.extract_strided_slice %390 {offsets = [0, 64], sizes = [8, 32], strides = [1, 1]} : vector<8x128xf32> to vector<8x32xf32>
    %394 = vector.extract_strided_slice %390 {offsets = [0, 96], sizes = [8, 32], strides = [1, 1]} : vector<8x128xf32> to vector<8x32xf32>
    %395 = arith.mulf %392, %384 : vector<8x32xf32>
    %396 = arith.mulf %391, %393 : vector<8x32xf32>
    %397 = arith.addf %395, %396 : vector<8x32xf32>
    %398 = math.tanh %397 : vector<8x32xf32>
    %399 = arith.mulf %394, %398 : vector<8x32xf32>
    %400 = tpu.concatenate %382, %399 in 1 : vector<8x32xf32>, vector<8x32xf32> -> vector<8x64xf32>
    %401 = arith.truncf %400 : vector<8x64xf32> to vector<8x64xbf16>
    %c0_73 = arith.constant 0 : index
    %c0_74 = arith.constant 0 : index
    %402 = vector.load %arg8[%c0_73, %c0_74] : memref<64x128xbf16, #tpu.memory_space<vmem>>, vector<64x128xbf16>
    %cst_75 = arith.constant dense<0.000000e+00> : vector<8x128xf32>
    %403 = tpu.matmul %401, %402, %cst_75 {dimension_numbers = #tpu.dot_dimension_numbers<[1], [0], [0], [1], [0, 0, 1, 1], [], []>} : vector<8x64xbf16>, vector<64x128xbf16>, vector<8x128xf32> -> vector<8x128xf32>
    %c0_76 = arith.constant 0 : index
    %c0_77 = arith.constant 0 : index
    %404 = vector.load %arg9[%c0_76, %c0_77] : memref<1x128xf32, #tpu.memory_space<vmem>>, vector<1x128xf32>
    %405 = vector.broadcast %404 : vector<1x128xf32> to vector<8x128xf32>
    %406 = arith.addf %403, %405 : vector<8x128xf32>
    %c0_78 = arith.constant 0 : index
    %c0_79 = arith.constant 0 : index
    %407 = vector.load %arg10[%c0_78, %c0_79] : memref<8x128xf32, #tpu.memory_space<vmem>>, vector<8x128xf32>
    tpu.vector_store %arg10[%c0_78, %c0_79], %406 {strides = array<i32>} : memref<8x128xf32, #tpu.memory_space<vmem>>, vector<8x128xf32>,
    return
  }
}

</mosaic_0001>

<llo_original>
// kernel: sentence_classifier_forward.1
$region0: #{sentence_classifier_forward.1}
  #allocation0 [shape = 'u32[]', space=smem, size = 0x4, offset = 0x4, fixed_abs, tag = 'smem constant byte address 0x4 - core index']
  #allocation1 [shape = 'u32[144,128]{1,0:T(1,128)}', space=vmem, size = 0x12000, scoped, tag = 'internal scratch']
  %s0 = inlined_call_operand.vmem [shape: s32[64,1], index: 0, kind: input, shape index: {}]
  %s1 = inlined_call_operand.vmem [shape: bf16[128,16], index: 1, kind: input, shape index: {}]
  %s2 = inlined_call_operand.vmem [shape: bf16[16,256], index: 2, kind: input, shape index: {}]
  %s3 = inlined_call_operand.vmem [shape: bf16[64,256], index: 3, kind: input, shape index: {}]
  %s4 = inlined_call_operand.hbm [shape: f32[1,256], index: 4, kind: input, shape index: {}]
  %s5 = inlined_call_operand.vmem [shape: bf16[64,256], index: 5, kind: input, shape index: {}]
  %s6 = inlined_call_operand.hbm [shape: bf16[32,128], index: 6, kind: input, shape index: {}]
  %s7 = inlined_call_operand.hbm [shape: f32[1,256], index: 7, kind: input, shape index: {}]
  %s8 = inlined_call_operand.vmem [shape: bf16[64,128], index: 8, kind: input, shape index: {}]
  %s9 = inlined_call_operand.vmem [shape: f32[1,128], index: 9, kind: input, shape index: {}]
  %s10 = inlined_call_operand.vmem [shape: f32[8,128], index: 10, kind: output, shape index: {}]
  %s11 = sld [smem:[#allocation0]]
  $region62: #{sentence_classifier_forward.1} parent=0
    _
  %s13 = ssub.s32 1, %s11
  %s14 = scalar_select 0, %s13, %s11
  $region1: #{sentence_classifier_forward.1} parent=0
    #allocation2 [shape = 'u8[1024]{0}', space=vmem, size = 0x400, scoped, tag = 'input window, operand 4, single buffered']
    #allocation3 [shape = 's32[1]{0}', space=sflag, size = 0x4, scoped, tag = 'scoped memory for sentence_classifier_forward.1']
    #allocation4 [shape = 'u8[8192]{0}', space=vmem, size = 0x2000, scoped, tag = 'input window, operand 6, single buffered']
    #allocation5 [shape = 's32[1]{0}', space=sflag, size = 0x4, scoped, tag = 'scoped memory for sentence_classifier_forward.1']
    #allocation6 [shape = 'u8[1024]{0}', space=vmem, size = 0x400, scoped, tag = 'input window, operand 7, single buffered']
    %15 = vsyncpa [#allocation3], 0
    %16 = vsyncpa [#allocation5], 0
    // Predicated region
    $region2: #{sentence_classifier_forward.1} parent=1 // pred_check
      _
    $region3: #{sentence_classifier_forward.1} parent=1 // pred_check_branch
      %18 = sbr.rel (0) target = $region5
    $region4: #{sentence_classifier_forward.1} parent=1 // pred_region
      _
    $region5: #{sentence_classifier_forward.1} parent=1 // pred_fallthru
      _
    // Predicated region
    $region6: #{sentence_classifier_forward.1} parent=1 // pred_check
      _
    $region7: #{sentence_classifier_forward.1} parent=1 // pred_check_branch
      %20 = sbr.rel (0) target = $region9
    $region8: #{sentence_classifier_forward.1} parent=1 // pred_region
      _
    $region9: #{sentence_classifier_forward.1} parent=1 // pred_fallthru
      _
    // Predicated region
    $region10: #{sentence_classifier_forward.1} parent=1 // pred_check
      _
    $region11: #{sentence_classifier_forward.1} parent=1 // pred_check_branch
      %22 = sbr.rel (0) target = $region13
    $region12: #{sentence_classifier_forward.1} parent=1 // pred_region
      _
    $region13: #{sentence_classifier_forward.1} parent=1 // pred_fallthru
      _
    // Predicated region
    $region14: #{sentence_classifier_forward.1} parent=1 // pred_check
      _
    $region15: #{sentence_classifier_forward.1} parent=1 // pred_check_branch
      %24 = sbr.rel (0) target = $region17
    $region16: #{sentence_classifier_forward.1} parent=1 // pred_region
      _
    $region17: #{sentence_classifier_forward.1} parent=1 // pred_fallthru
      _
    // Predicated region
    $region18: #{sentence_classifier_forward.1} parent=1 // pred_check
      _
    $region19: #{sentence_classifier_forward.1} parent=1 // pred_check_branch
      %26 = sbr.rel (0) target = $region21
    $region20: #{sentence_classifier_forward.1} parent=1 // pred_region
      %s28 = ssub.s32 32, 32
      %29 = vsyncadd [#allocation3], %s28
      %s31 = sshll.u32 [#allocation2], 4
      %s32 = int_to_ptr.vmem [resolvable:$true] %s31
      %34 = dma.hbm_to_vmem [thread:$0]  %s4, 32, %s32, [#allocation3]
    $region21: #{sentence_classifier_forward.1} parent=1 // pred_fallthru
      _
    // Predicated region
    $region22: #{sentence_classifier_forward.1} parent=1 // pred_check
      _
    $region23: #{sentence_classifier_forward.1} parent=1 // pred_check_branch
      %36 = sbr.rel (0) target = $region25
    $region24: #{sentence_classifier_forward.1} parent=1 // pred_region
      _
    $region25: #{sentence_classifier_forward.1} parent=1 // pred_fallthru
      _
    // Predicated region
    $region26: #{sentence_classifier_forward.1} parent=1 // pred_check
      _
    $region27: #{sentence_classifier_forward.1} parent=1 // pred_check_branch
      %38 = sbr.rel (0) target = $region29
    $region28: #{sentence_classifier_forward.1} parent=1 // pred_region
      %s40 = ssub.s32 256, 256
      %41 = vsyncadd [#allocation5], %s40
      %s42 = sshll.u32 [#allocation4], 4
      %s43 = int_to_ptr.vmem [resolvable:$true] %s42
      %48 = dma.hbm_to_vmem [thread:$0]  %s6, 256, %s43, [#allocation5], 64, 64, 4
    $region29: #{sentence_classifier_forward.1} parent=1 // pred_fallthru
      _
    // Predicated region
    $region30: #{sentence_classifier_forward.1} parent=1 // pred_check
      _
    $region31: #{sentence_classifier_forward.1} parent=1 // pred_check_branch
      %50 = sbr.rel (0) target = $region33
    $region32: #{sentence_classifier_forward.1} parent=1 // pred_region
      %s52 = ssub.s32 32, 32
      %53 = vsyncadd [#allocation5], %s52
      %s55 = sshll.u32 [#allocation6], 4
      %s56 = int_to_ptr.vmem [resolvable:$true] %s55
      %58 = dma.hbm_to_vmem [thread:$0]  %s7, 32, %s56, [#allocation5]
    $region33: #{sentence_classifier_forward.1} parent=1 // pred_fallthru
      _
    // Predicated region
    $region34: #{sentence_classifier_forward.1} parent=1 // pred_check
      _
    $region35: #{sentence_classifier_forward.1} parent=1 // pred_check_branch
      %60 = sbr.rel (0) target = $region37
    $region36: #{sentence_classifier_forward.1} parent=1 // pred_region
      _
    $region37: #{sentence_classifier_forward.1} parent=1 // pred_fallthru
      _
    // Predicated region
    $region38: #{sentence_classifier_forward.1} parent=1 // pred_check
      _
    $region39: #{sentence_classifier_forward.1} parent=1 // pred_check_branch
      %62 = sbr.rel (0) target = $region41
    $region40: #{sentence_classifier_forward.1} parent=1 // pred_region
      _
    $region41: #{sentence_classifier_forward.1} parent=1 // pred_fallthru
      _
    // Predicated region
    $region42: #{sentence_classifier_forward.1} parent=1 // pred_check
      _
    $region43: #{sentence_classifier_forward.1} parent=1 // pred_check_branch
      %64 = sbr.rel (0) target = $region45
    $region44: #{sentence_classifier_forward.1} parent=1 // pred_region
      %65 = dma.done [#allocation3], 32
    $region45: #{sentence_classifier_forward.1} parent=1 // pred_fallthru
      _
    // Predicated region
    $region46: #{sentence_classifier_forward.1} parent=1 // pred_check
      _
    $region47: #{sentence_classifier_forward.1} parent=1 // pred_check_branch
      %67 = sbr.rel (0) target = $region49
    $region48: #{sentence_classifier_forward.1} parent=1 // pred_region
      %68 = dma.done [#allocation5], 256
    $region49: #{sentence_classifier_forward.1} parent=1 // pred_fallthru
      _
    // Predicated region
    $region50: #{sentence_classifier_forward.1} parent=1 // pred_check
      _
    $region51: #{sentence_classifier_forward.1} parent=1 // pred_check_branch
      %70 = sbr.rel (0) target = $region53
    $region52: #{sentence_classifier_forward.1} parent=1 // pred_region
      %71 = dma.done [#allocation5], 32
    $region53: #{sentence_classifier_forward.1} parent=1 // pred_fallthru
      _
    %v73 = vlaneseq
    %v74 = vand.u32 %v73, 127
    %vm75 = vcmp.ge.s32.totalorder %v74, 64
    %vm76 = vcmp.lt.s32.totalorder %v74, 96
    %vm77 = vmand %vm75, %vm76
    %v78 = vadd.s32 %v74, 128
    %vm79 = vcmp.ge.s32.totalorder %v74, 128
    %vm80 = vcmp.ge.s32.totalorder %v78, 128
    %vm81 = vcmp.lt.s32.totalorder %v74, 192
    %vm82 = vcmp.lt.s32.totalorder %v78, 192
    %vm83 = vmand %vm79, %vm81
    %vm84 = vmand %vm80, %vm82
    %vm85 = vcmp.lt.s32.totalorder %v74, 32
    %vm86 = vcmp.lt.s32.totalorder %v78, 32
    %vm87 = vcmp.ge.s32.totalorder %v78, 64
    %vm88 = vcmp.lt.s32.totalorder %v78, 96
    %vm89 = vmand %vm87, %vm88
    %vm90 = vmor %vm85, %vm77
    %vm91 = vmor %vm86, %vm89
    %vm92 = vcmp.lt.s32.totalorder %v74, 160
    %vm93 = vcmp.lt.s32.totalorder %v78, 160
    %vm94 = vmand %vm79, %vm92
    %vm95 = vmand %vm80, %vm93
    %vm96 = vmor %vm90, %vm94
    %vm97 = vmor %vm91, %vm95
    %vm98 = vcmp.ge.s32.totalorder %v74, 192
    %vm99 = vcmp.ge.s32.totalorder %v78, 192
    %vm100 = vcmp.lt.s32.totalorder %v74, 224
    %vm101 = vcmp.lt.s32.totalorder %v78, 224
    %vm102 = vmand %vm98, %vm100
    %vm103 = vmand %vm99, %vm101
    %vm104 = vmor %vm96, %vm102
    %vm105 = vmor %vm97, %vm103
    %v106 = vld [vmem:[%s0] sm:$0xff]
    %v107 = vld [vmem:[%s0 + $0x8] sm:$0xff]
    %v108 = vld [vmem:[%s0 + $0x10] sm:$0xff]
    %v109 = vld [vmem:[%s0 + $0x18] sm:$0xff]
    %v110 = vld [vmem:[%s0 + $0x20] sm:$0xff]
    %v111 = vld [vmem:[%s0 + $0x28] sm:$0xff]
    %v112 = vld [vmem:[%s0 + $0x30] sm:$0xff]
    %v113 = vld [vmem:[%s0 + $0x38] sm:$0xff]
    %114 = vset.pattern.permute.xlu0 0
    %115 = vperm.xlu0 %114, %v106
    %v116 = vpop.permute.xlu0 %115
    %117 = vset.pattern.permute.xlu0 0
    %118 = vperm.xlu0 %117, %v107
    %v119 = vpop.permute.xlu0 %118
    %120 = vset.pattern.permute.xlu0 0
    %121 = vperm.xlu0 %120, %v108
    %v122 = vpop.permute.xlu0 %121
    %123 = vset.pattern.permute.xlu0 0
    %124 = vperm.xlu0 %123, %v109
    %v125 = vpop.permute.xlu0 %124
    %126 = vset.pattern.permute.xlu0 0
    %127 = vperm.xlu0 %126, %v110
    %v128 = vpop.permute.xlu0 %127
    %129 = vset.pattern.permute.xlu0 0
    %130 = vperm.xlu0 %129, %v111
    %v131 = vpop.permute.xlu0 %130
    %132 = vset.pattern.permute.xlu0 0
    %133 = vperm.xlu0 %132, %v112
    %v134 = vpop.permute.xlu0 %133
    %135 = vset.pattern.permute.xlu0 0
    %136 = vperm.xlu0 %135, %v113
    %v137 = vpop.permute.xlu0 %136
    %vm138 = vcmp.eq.s32.totalorder %v74, %v116
    %vm139 = vcmp.eq.s32.totalorder %v74, %v119
    %vm140 = vcmp.eq.s32.totalorder %v74, %v122
    %vm141 = vcmp.eq.s32.totalorder %v74, %v125
    %vm142 = vcmp.eq.s32.totalorder %v74, %v128
    %vm143 = vcmp.eq.s32.totalorder %v74, %v131
    %vm144 = vcmp.eq.s32.totalorder %v74, %v134
    %vm145 = vcmp.eq.s32.totalorder %v74, %v137
    %v146 = vsel %vm138, 1, 0
    %v147 = vsel %vm139, 1, 0
    %v148 = vsel %vm140, 1, 0
    %v149 = vsel %vm141, 1, 0
    %v150 = vsel %vm142, 1, 0
    %v151 = vsel %vm143, 1, 0
    %v152 = vsel %vm144, 1, 0
    %v153 = vsel %vm145, 1, 0
    %v154 = vcvt.s32.f32 %v146
    %v155 = vcvt.s32.f32 %v147
    %v156 = vcvt.s32.f32 %v148
    %v157 = vcvt.s32.f32 %v149
    %v158 = vcvt.s32.f32 %v150
    %v159 = vcvt.s32.f32 %v151
    %v160 = vcvt.s32.f32 %v152
    %v161 = vcvt.s32.f32 %v153
    %v162 = vpack.c.bf16 %v155, %v154
    %v163 = vpack.c.bf16 %v157, %v156
    %v164 = vpack.c.bf16 %v159, %v158
    %v165 = vpack.c.bf16 %v161, %v160
    %v166 = vld [vmem:[%s1] sm:$0xf]
    %v167 = vld [vmem:[%s1 + $0x4] sm:$0xf]
    %v168 = vld [vmem:[%s1 + $0x8] sm:$0xf]
    %v169 = vld [vmem:[%s1 + $0xc] sm:$0xf]
    %v170 = vld [vmem:[%s1 + $0x10] sm:$0xf]
    %v171 = vld [vmem:[%s1 + $0x14] sm:$0xf]
    %v172 = vld [vmem:[%s1 + $0x18] sm:$0xf]
    %v173 = vld [vmem:[%s1 + $0x1c] sm:$0xf]
    %v174 = vld [vmem:[%s1 + $0x20] sm:$0xf]
    %v175 = vld [vmem:[%s1 + $0x24] sm:$0xf]
    %v176 = vld [vmem:[%s1 + $0x28] sm:$0xf]
    %v177 = vld [vmem:[%s1 + $0x2c] sm:$0xf]
    %v178 = vld [vmem:[%s1 + $0x30] sm:$0xf]
    %v179 = vld [vmem:[%s1 + $0x34] sm:$0xf]
    %v180 = vld [vmem:[%s1 + $0x38] sm:$0xf]
    %v181 = vld [vmem:[%s1 + $0x3c] sm:$0xf]
    %v198 = vunpack.c.l.b16 %v166
    %v199 = vunpack.c.l.b16 %v167
    %v200 = vunpack.c.l.b16 %v168
    %v201 = vunpack.c.l.b16 %v169
    %v202 = vunpack.c.l.b16 %v170
    %v203 = vunpack.c.l.b16 %v171
    %v204 = vunpack.c.l.b16 %v172
    %v205 = vunpack.c.l.b16 %v173
    %v206 = vunpack.c.l.b16 %v174
    %v207 = vunpack.c.l.b16 %v175
    %v208 = vunpack.c.l.b16 %v176
    %v209 = vunpack.c.l.b16 %v177
    %v210 = vunpack.c.l.b16 %v178
    %v211 = vunpack.c.l.b16 %v179
    %v212 = vunpack.c.l.b16 %v180
    %v213 = vunpack.c.l.b16 %v181
    %v214 = vpack.c.b16 %v199, %v198
    %v215 = vpack.c.b16 %v201, %v200
    %v216 = vpack.c.b16 %v203, %v202
    %v217 = vpack.c.b16 %v205, %v204
    %v218 = vpack.c.b16 %v207, %v206
    %v219 = vpack.c.b16 %v209, %v208
    %v220 = vpack.c.b16 %v211, %v210
    %v221 = vpack.c.b16 %v213, %v212
    %230 = vmatprep.subr.bf16.mxu0 0
    %231 = vmatpush1.bf16.msra.mxu0 %v221
    %232 = vmatprep.subr.bf16.mxu0 0
    %233 = vmatpush1.bf16.msra.mxu0 %v220
    %234 = vmatprep.subr.bf16.mxu0 0
    %235 = vmatpush1.bf16.msra.mxu0 %v219
    %236 = vmatprep.subr.bf16.mxu0 0
    %237 = vmatpush1.bf16.msra.mxu0 %v218
    %238 = vmatprep.subr.bf16.mxu0 0
    %239 = vmatpush1.bf16.msra.mxu0 %v217
    %240 = vmatprep.subr.bf16.mxu0 0
    %241 = vmatpush1.bf16.msra.mxu0 %v216
    %242 = vmatprep.subr.bf16.mxu0 0
    %243 = vmatpush1.bf16.msra.mxu0 %v215
    %244 = vmatprep.subr.bf16.mxu0 0
    %245 = vmatpush1.bf16.msra.mxu0 %v214
    %246 = vmatprep.subr.bf16.mxu0 0
    %247 = vmatpush2.bf16.msra.mxu0 0
    %248 = vmatprep.subr.bf16.mxu0 0
    %249 = vmatpush2.bf16.msra.mxu0 0
    %250 = vmatprep.subr.bf16.mxu0 0
    %251 = vmatpush2.bf16.msra.mxu0 0
    %252 = vmatprep.subr.bf16.mxu0 0
    %253 = vmatpush2.bf16.msra.mxu0 0
    %254 = vmatprep.subr.bf16.mxu0 0
    %255 = vmatpush2.bf16.msra.mxu0 0
    %256 = vmatprep.subr.bf16.mxu0 0
    %257 = vmatpush2.bf16.msra.mxu0 0
    %258 = vmatprep.subr.bf16.mxu0 0
    %259 = vmatpush2.bf16.msra.mxu0 0
    %260 = vmatprep.subr.bf16.mxu0 0
    %261 = vmatpush2.bf16.msra.mxu0 0
    %262 = vmatprep.mubr.bf16.mxu0 0
    %263 = vmatmul.mubr.bf16.gmra.mxu0 %v162
    %v264 = vpop.f32.mrf.mxu0
    %v265 = vadd.f32 0.0, %v264
    %v266 = vpop.f32.mrf.mxu0
    %v267 = vpop.f32.mrf.mxu0
    %v268 = vadd.f32 0.0, %v267
    %v269 = vpop.f32.mrf.mxu0
    %270 = vmatprep.mubr.bf16.mxu0 0
    %271 = vmatmul.mubr.bf16.gmra.mxu0 %v163
    %v272 = vpop.f32.mrf.mxu0
    %v273 = vadd.f32 0.0, %v272
    %v274 = vpop.f32.mrf.mxu0
    %v275 = vpop.f32.mrf.mxu0
    %v276 = vadd.f32 0.0, %v275
    %v277 = vpop.f32.mrf.mxu0
    %278 = vmatprep.mubr.bf16.mxu0 0
    %279 = vmatmul.mubr.bf16.gmra.mxu0 %v164
    %v280 = vpop.f32.mrf.mxu0
    %v281 = vadd.f32 0.0, %v280
    %v282 = vpop.f32.mrf.mxu0
    %v283 = vpop.f32.mrf.mxu0
    %v284 = vadd.f32 0.0, %v283
    %v285 = vpop.f32.mrf.mxu0
    %286 = vmatprep.mubr.bf16.mxu0 0
    %287 = vmatmul.mubr.bf16.gmra.mxu0 %v165
    %v288 = vpop.f32.mrf.mxu0
    %v289 = vadd.f32 0.0, %v288
    %v290 = vpop.f32.mrf.mxu0
    %v291 = vpop.f32.mrf.mxu0
    %v292 = vadd.f32 0.0, %v291
    %v293 = vpop.f32.mrf.mxu0
    %294 = vdwg.mxu0
    %v295 = vpack.c.bf16 %v268, %v265
    %v296 = vpack.c.bf16 %v276, %v273
    %v297 = vpack.c.bf16 %v284, %v281
    %v298 = vpack.c.bf16 %v292, %v289
    %v299 = vld [vmem:[%s2] sm:$0xff]
    %v300 = vld [vmem:[%s2 + $0x8] sm:$0xff]
    %v301 = vld [vmem:[#allocation2] sm:$0x3]
    %v303 = vlaneseq
    %v304 = vshrl.u32 %v303, 7
    %v305 = vsub.s32 0, %v304
    %v306 = vrot.slane %v301, %v305
    %v307 = vlaneseq
    %v308 = vshrl.u32 %v307, 7
    %v309 = vsub.s32 1, %v308
    %v310 = vrot.slane %v301, %v309
    %v315 = vunpack.c.l.b16 %v299
    %v316 = vunpack.c.h.b16 %v299
    %v317 = vunpack.c.l.b16 %v300
    %v318 = vunpack.c.h.b16 %v300
    %v319 = vpack.c.b16 %v317, %v315
    %v320 = vpack.c.b16 %v318, %v316
    %vm323 = vcmask 130048
    %v325 = vsel %vm323, %v295, 0
    %v328 = vsel %vm323, %v296, 0
    %v331 = vsel %vm323, %v297, 0
    %v334 = vsel %vm323, %v298, 0
    %336 = vmatprep.subr.bf16.mxu0 0
    %337 = vmatpush1.bf16.msra.mxu0 0
    %338 = vmatprep.subr.bf16.mxu0 0
    %339 = vmatpush1.bf16.msra.mxu0 0
    %340 = vmatprep.subr.bf16.mxu0 0
    %341 = vmatpush1.bf16.msra.mxu0 0
    %342 = vmatprep.subr.bf16.mxu0 0
    %343 = vmatpush1.bf16.msra.mxu0 0
    %344 = vmatprep.subr.bf16.mxu0 0
    %345 = vmatpush1.bf16.msra.mxu0 0
    %346 = vmatprep.subr.bf16.mxu0 0
    %347 = vmatpush1.bf16.msra.mxu0 0
    %348 = vmatprep.subr.bf16.mxu0 0
    %349 = vmatpush1.bf16.msra.mxu0 0
    %350 = vmatprep.subr.bf16.mxu0 %v320
    %351 = vmatpush1.bf16.msra.mxu0 %v319
    %352 = vmatprep.subr.bf16.mxu0 0
    %353 = vmatpush2.bf16.msra.mxu0 0
    %354 = vmatprep.subr.bf16.mxu0 0
    %355 = vmatpush2.bf16.msra.mxu0 0
    %356 = vmatprep.subr.bf16.mxu0 0
    %357 = vmatpush2.bf16.msra.mxu0 0
    %358 = vmatprep.subr.bf16.mxu0 0
    %359 = vmatpush2.bf16.msra.mxu0 0
    %360 = vmatprep.subr.bf16.mxu0 0
    %361 = vmatpush2.bf16.msra.mxu0 0
    %362 = vmatprep.subr.bf16.mxu0 0
    %363 = vmatpush2.bf16.msra.mxu0 0
    %364 = vmatprep.subr.bf16.mxu0 0
    %365 = vmatpush2.bf16.msra.mxu0 0
    %366 = vmatprep.subr.bf16.mxu0 0
    %367 = vmatpush2.bf16.msra.mxu0 0
    %368 = vmatprep.mubr.bf16.mxu0 0
    %369 = vmatmul.mubr.bf16.gmra.mxu0 %v325
    %v370 = vpop.f32.mrf.mxu0
    %v371 = vadd.f32 %v306, %v370
    %v372 = vpop.f32.mrf.mxu0
    %v373 = vadd.f32 %v310, %v372
    %v374 = vpop.f32.mrf.mxu0
    %v375 = vadd.f32 %v306, %v374
    %v376 = vpop.f32.mrf.mxu0
    %v377 = vadd.f32 %v310, %v376
    %378 = vmatprep.mubr.bf16.mxu0 0
    %379 = vmatmul.mubr.bf16.gmra.mxu0 %v328
    %v380 = vpop.f32.mrf.mxu0
    %v381 = vadd.f32 %v306, %v380
    %v382 = vpop.f32.mrf.mxu0
    %v383 = vadd.f32 %v310, %v382
    %v384 = vpop.f32.mrf.mxu0
    %v385 = vadd.f32 %v306, %v384
    %v386 = vpop.f32.mrf.mxu0
    %v387 = vadd.f32 %v310, %v386
    %388 = vmatprep.mubr.bf16.mxu0 0
    %389 = vmatmul.mubr.bf16.gmra.mxu0 %v331
    %v390 = vpop.f32.mrf.mxu0
    %v391 = vadd.f32 %v306, %v390
    %v392 = vpop.f32.mrf.mxu0
    %v393 = vadd.f32 %v310, %v392
    %v394 = vpop.f32.mrf.mxu0
    %v395 = vadd.f32 %v306, %v394
    %v396 = vpop.f32.mrf.mxu0
    %v397 = vadd.f32 %v310, %v396
    %398 = vmatprep.mubr.bf16.mxu0 0
    %399 = vmatmul.mubr.bf16.gmra.mxu0 %v334
    %v400 = vpop.f32.mrf.mxu0
    %v401 = vadd.f32 %v306, %v400
    %v402 = vpop.f32.mrf.mxu0
    %v403 = vadd.f32 %v310, %v402
    %v404 = vpop.f32.mrf.mxu0
    %v405 = vadd.f32 %v306, %v404
    %v406 = vpop.f32.mrf.mxu0
    %v407 = vadd.f32 %v310, %v406
    %408 = vdwg.mxu0
    %v409 = vld [vmem:[%s3] sm:$0xff]
    %v410 = vld [vmem:[%s3 + $0x8] sm:$0xff]
    %v411 = vld [vmem:[%s3 + $0x10] sm:$0xff]
    %v412 = vld [vmem:[%s3 + $0x18] sm:$0xff]
    %v413 = vld [vmem:[%s3 + $0x20] sm:$0xff]
    %v414 = vld [vmem:[%s3 + $0x28] sm:$0xff]
    %v415 = vld [vmem:[%s3 + $0x30] sm:$0xff]
    %v416 = vld [vmem:[%s3 + $0x38] sm:$0xff]
    %v417 = vsel %vm104, %v371, %v405
    %v418 = vsel %vm105, %v373, %v407
    %v419 = vtanh.pop %v417
    %v420 = vtanh.pop %v418
    %v421 = vmul.f32 %v419, 0.5
    %v422 = vmul.f32 %v420, 0.5
    %v423 = vadd.f32 %v421, 0.5
    %v424 = vadd.f32 %v422, 0.5
    %v425 = vsel %vm83, %v419, %v423
    %v426 = vsel %vm84, %v420, %v424
    %v427 = vmul.f32 %v425, 0.0
    %v428 = vmul.f32 %v425, %v426
    %430 = vrot.lane.b32.xlu0 %v428, 64
    %v431 = vpop.permute.xlu0 %430
    %v433 = vadd.f32 %v427, %v431
    %v434 = vtanh.pop %v433
    %v435 = vmul.f32 %v426, %v434
    %v436 = vsel %vm104, %v375, %v401
    %v437 = vsel %vm105, %v377, %v403
    %v438 = vpack.c.bf16 %v435, %v435
    %440 = vrot.lane.b32.xlu0 %v438, 64
    %v441 = vpop.permute.xlu0 %440
    %v450 = vunpack.c.l.b16 %v409
    %v451 = vunpack.c.h.b16 %v409
    %v452 = vunpack.c.l.b16 %v410
    %v453 = vunpack.c.h.b16 %v410
    %v454 = vunpack.c.l.b16 %v411
    %v455 = vunpack.c.h.b16 %v411
    %v456 = vunpack.c.l.b16 %v412
    %v457 = vunpack.c.h.b16 %v412
    %v458 = vunpack.c.l.b16 %v413
    %v459 = vunpack.c.h.b16 %v413
    %v460 = vunpack.c.l.b16 %v414
    %v461 = vunpack.c.h.b16 %v414
    %v462 = vunpack.c.l.b16 %v415
    %v463 = vunpack.c.h.b16 %v415
    %v464 = vunpack.c.l.b16 %v416
    %v465 = vunpack.c.h.b16 %v416
    %v466 = vpack.c.b16 %v452, %v450
    %v467 = vpack.c.b16 %v453, %v451
    %v468 = vpack.c.b16 %v456, %v454
    %v469 = vpack.c.b16 %v457, %v455
    %v470 = vpack.c.b16 %v460, %v458
    %v471 = vpack.c.b16 %v461, %v459
    %v472 = vpack.c.b16 %v464, %v462
    %v473 = vpack.c.b16 %v465, %v463
    %vm482 = vcmask 523264
    %v484 = vsel %vm482, %v441, 0
    %486 = vmatprep.subr.bf16.mxu0 0
    %487 = vmatpush1.bf16.msra.mxu0 0
    %488 = vmatprep.subr.bf16.mxu0 0
    %489 = vmatpush1.bf16.msra.mxu0 0
    %490 = vmatprep.subr.bf16.mxu0 0
    %491 = vmatpush1.bf16.msra.mxu0 0
    %492 = vmatprep.subr.bf16.mxu0 0
    %493 = vmatpush1.bf16.msra.mxu0 0
    %494 = vmatprep.subr.bf16.mxu0 %v473
    %495 = vmatpush1.bf16.msra.mxu0 %v472
    %496 = vmatprep.subr.bf16.mxu0 %v471
    %497 = vmatpush1.bf16.msra.mxu0 %v470
    %498 = vmatprep.subr.bf16.mxu0 %v469
    %499 = vmatpush1.bf16.msra.mxu0 %v468
    %500 = vmatprep.subr.bf16.mxu0 %v467
    %501 = vmatpush1.bf16.msra.mxu0 %v466
    %502 = vmatprep.subr.bf16.mxu0 0
    %503 = vmatpush2.bf16.msra.mxu0 0
    %504 = vmatprep.subr.bf16.mxu0 0
    %505 = vmatpush2.bf16.msra.mxu0 0
    %506 = vmatprep.subr.bf16.mxu0 0
    %507 = vmatpush2.bf16.msra.mxu0 0
    %508 = vmatprep.subr.bf16.mxu0 0
    %509 = vmatpush2.bf16.msra.mxu0 0
    %510 = vmatprep.subr.bf16.mxu0 0
    %511 = vmatpush2.bf16.msra.mxu0 0
    %512 = vmatprep.subr.bf16.mxu0 0
    %513 = vmatpush2.bf16.msra.mxu0 0
    %514 = vmatprep.subr.bf16.mxu0 0
    %515 = vmatpush2.bf16.msra.mxu0 0
    %516 = vmatprep.subr.bf16.mxu0 0
    %517 = vmatpush2.bf16.msra.mxu0 0
    %518 = vmatprep.mubr.bf16.mxu0 0
    %519 = vmatmul.mubr.bf16.gmra.mxu0 %v484
    %v520 = vpop.f32.mrf.mxu0
    %v521 = vadd.f32 0.0, %v520
    %v522 = vpop.f32.mrf.mxu0
    %v523 = vadd.f32 0.0, %v522
    %v524 = vpop.f32.mrf.mxu0
    %v525 = vpop.f32.mrf.mxu0
    %526 = vdwg.mxu0
    %v527 = vadd.f32 %v436, %v521
    %v528 = vadd.f32 %v437, %v523
    %v529 = vtanh.pop %v527
    %v530 = vtanh.pop %v528
    %v531 = vmul.f32 %v529, 0.5
    %v532 = vmul.f32 %v530, 0.5
    %v533 = vadd.f32 %v531, 0.5
    %v534 = vadd.f32 %v532, 0.5
    %v535 = vsel %vm83, %v529, %v533
    %v536 = vsel %vm84, %v530, %v534
    %v537 = vmul.f32 %v535, %v433
    %v538 = vmul.f32 %v535, %v536
    %540 = vrot.lane.b32.xlu0 %v538, 64
    %v541 = vpop.permute.xlu0 %540
    %v543 = vadd.f32 %v537, %v541
    %v544 = vtanh.pop %v543
    %v545 = vmul.f32 %v536, %v544
    %v546 = vsel %vm104, %v381, %v395
    %v547 = vsel %vm105, %v383, %v397
    %v548 = vpack.c.bf16 %v545, %v545
    %550 = vrot.lane.b32.xlu0 %v548, 64
    %v551 = vpop.permute.xlu0 %550
    %v553 = vsel %vm482, %v551, 0
    %555 = vmatprep.subr.bf16.mxu0 0
    %556 = vmatpush1.bf16.msra.mxu0 0
    %557 = vmatprep.subr.bf16.mxu0 0
    %558 = vmatpush1.bf16.msra.mxu0 0
    %559 = vmatprep.subr.bf16.mxu0 0
    %560 = vmatpush1.bf16.msra.mxu0 0
    %561 = vmatprep.subr.bf16.mxu0 0
    %562 = vmatpush1.bf16.msra.mxu0 0
    %563 = vmatprep.subr.bf16.mxu0 %v473
    %564 = vmatpush1.bf16.msra.mxu0 %v472
    %565 = vmatprep.subr.bf16.mxu0 %v471
    %566 = vmatpush1.bf16.msra.mxu0 %v470
    %567 = vmatprep.subr.bf16.mxu0 %v469
    %568 = vmatpush1.bf16.msra.mxu0 %v468
    %569 = vmatprep.subr.bf16.mxu0 %v467
    %570 = vmatpush1.bf16.msra.mxu0 %v466
    %571 = vmatprep.subr.bf16.mxu0 0
    %572 = vmatpush2.bf16.msra.mxu0 0
    %573 = vmatprep.subr.bf16.mxu0 0
    %574 = vmatpush2.bf16.msra.mxu0 0
    %575 = vmatprep.subr.bf16.mxu0 0
    %576 = vmatpush2.bf16.msra.mxu0 0
    %577 = vmatprep.subr.bf16.mxu0 0
    %578 = vmatpush2.bf16.msra.mxu0 0
    %579 = vmatprep.subr.bf16.mxu0 0
    %580 = vmatpush2.bf16.msra.mxu0 0
    %581 = vmatprep.subr.bf16.mxu0 0
    %582 = vmatpush2.bf16.msra.mxu0 0
    %583 = vmatprep.subr.bf16.mxu0 0
    %584 = vmatpush2.bf16.msra.mxu0 0
    %585 = vmatprep.subr.bf16.mxu0 0
    %586 = vmatpush2.bf16.msra.mxu0 0
    %587 = vmatprep.mubr.bf16.mxu0 0
    %588 = vmatmul.mubr.bf16.gmra.mxu0 %v553
    %v589 = vpop.f32.mrf.mxu0
    %v590 = vadd.f32 0.0, %v589
    %v591 = vpop.f32.mrf.mxu0
    %v592 = vadd.f32 0.0, %v591
    %v593 = vpop.f32.mrf.mxu0
    %v594 = vpop.f32.mrf.mxu0
    %595 = vdwg.mxu0
    %v596 = vadd.f32 %v546, %v590
    %v597 = vadd.f32 %v547, %v592
    %v598 = vtanh.pop %v596
    %v599 = vtanh.pop %v597
    %v600 = vmul.f32 %v598, 0.5
    %v601 = vmul.f32 %v599, 0.5
    %v602 = vadd.f32 %v600, 0.5
    %v603 = vadd.f32 %v601, 0.5
    %v604 = vsel %vm83, %v598, %v602
    %v605 = vsel %vm84, %v599, %v603
    %v606 = vmul.f32 %v604, %v543
    %v607 = vmul.f32 %v604, %v605
    %609 = vrot.lane.b32.xlu0 %v607, 64
    %v610 = vpop.permute.xlu0 %609
    %v612 = vadd.f32 %v606, %v610
    %v613 = vtanh.pop %v612
    %v614 = vmul.f32 %v605, %v613
    %v615 = vsel %vm104, %v385, %v391
    %v616 = vsel %vm105, %v387, %v393
    %v617 = vpack.c.bf16 %v614, %v614
    %619 = vrot.lane.b32.xlu0 %v617, 64
    %v620 = vpop.permute.xlu0 %619
    %v622 = vsel %vm482, %v620, 0
    %624 = vmatprep.subr.bf16.mxu0 0
    %625 = vmatpush1.bf16.msra.mxu0 0
    %626 = vmatprep.subr.bf16.mxu0 0
    %627 = vmatpush1.bf16.msra.mxu0 0
    %628 = vmatprep.subr.bf16.mxu0 0
    %629 = vmatpush1.bf16.msra.mxu0 0
    %630 = vmatprep.subr.bf16.mxu0 0
    %631 = vmatpush1.bf16.msra.mxu0 0
    %632 = vmatprep.subr.bf16.mxu0 %v473
    %633 = vmatpush1.bf16.msra.mxu0 %v472
    %634 = vmatprep.subr.bf16.mxu0 %v471
    %635 = vmatpush1.bf16.msra.mxu0 %v470
    %636 = vmatprep.subr.bf16.mxu0 %v469
    %637 = vmatpush1.bf16.msra.mxu0 %v468
    %638 = vmatprep.subr.bf16.mxu0 %v467
    %639 = vmatpush1.bf16.msra.mxu0 %v466
    %640 = vmatprep.subr.bf16.mxu0 0
    %641 = vmatpush2.bf16.msra.mxu0 0
    %642 = vmatprep.subr.bf16.mxu0 0
    %643 = vmatpush2.bf16.msra.mxu0 0
    %644 = vmatprep.subr.bf16.mxu0 0
    %645 = vmatpush2.bf16.msra.mxu0 0
    %646 = vmatprep.subr.bf16.mxu0 0
    %647 = vmatpush2.bf16.msra.mxu0 0
    %648 = vmatprep.subr.bf16.mxu0 0
    %649 = vmatpush2.bf16.msra.mxu0 0
    %650 = vmatprep.subr.bf16.mxu0 0
    %651 = vmatpush2.bf16.msra.mxu0 0
    %652 = vmatprep.subr.bf16.mxu0 0
    %653 = vmatpush2.bf16.msra.mxu0 0
    %654 = vmatprep.subr.bf16.mxu0 0
    %655 = vmatpush2.bf16.msra.mxu0 0
    %656 = vmatprep.mubr.bf16.mxu0 0
    %657 = vmatmul.mubr.bf16.gmra.mxu0 %v622
    %v658 = vpop.f32.mrf.mxu0
    %v659 = vadd.f32 0.0, %v658
    %v660 = vpop.f32.mrf.mxu0
    %v661 = vadd.f32 0.0, %v660
    %v662 = vpop.f32.mrf.mxu0
    %v663 = vpop.f32.mrf.mxu0
    %664 = vdwg.mxu0
    %v665 = vadd.f32 %v615, %v659
    %v666 = vadd.f32 %v616, %v661
    %v667 = vtanh.pop %v665
    %v668 = vtanh.pop %v666
    %v669 = vmul.f32 %v667, 0.5
    %v670 = vmul.f32 %v668, 0.5
    %v671 = vadd.f32 %v669, 0.5
    %v672 = vadd.f32 %v670, 0.5
    %v673 = vsel %vm83, %v667, %v671
    %v674 = vsel %vm84, %v668, %v672
    %v675 = vmul.f32 %v673, %v612
    %v676 = vmul.f32 %v673, %v674
    %678 = vrot.lane.b32.xlu0 %v676, 64
    %v679 = vpop.permute.xlu0 %678
    %v681 = vadd.f32 %v675, %v679
    %v682 = vtanh.pop %v681
    %v683 = vmul.f32 %v674, %v682
    %v684 = vsel %vm104, %v391, %v385
    %v685 = vsel %vm105, %v393, %v387
    %v686 = vpack.c.bf16 %v683, %v683
    %688 = vrot.lane.b32.xlu0 %v686, 64
    %v689 = vpop.permute.xlu0 %688
    %v691 = vsel %vm482, %v689, 0
    %693 = vmatprep.subr.bf16.mxu0 0
    %694 = vmatpush1.bf16.msra.mxu0 0
    %695 = vmatprep.subr.bf16.mxu0 0
    %696 = vmatpush1.bf16.msra.mxu0 0
    %697 = vmatprep.subr.bf16.mxu0 0
    %698 = vmatpush1.bf16.msra.mxu0 0
    %699 = vmatprep.subr.bf16.mxu0 0
    %700 = vmatpush1.bf16.msra.mxu0 0
    %701 = vmatprep.subr.bf16.mxu0 %v473
    %702 = vmatpush1.bf16.msra.mxu0 %v472
    %703 = vmatprep.subr.bf16.mxu0 %v471
    %704 = vmatpush1.bf16.msra.mxu0 %v470
    %705 = vmatprep.subr.bf16.mxu0 %v469
    %706 = vmatpush1.bf16.msra.mxu0 %v468
    %707 = vmatprep.subr.bf16.mxu0 %v467
    %708 = vmatpush1.bf16.msra.mxu0 %v466
    %709 = vmatprep.subr.bf16.mxu0 0
    %710 = vmatpush2.bf16.msra.mxu0 0
    %711 = vmatprep.subr.bf16.mxu0 0
    %712 = vmatpush2.bf16.msra.mxu0 0
    %713 = vmatprep.subr.bf16.mxu0 0
    %714 = vmatpush2.bf16.msra.mxu0 0
    %715 = vmatprep.subr.bf16.mxu0 0
    %716 = vmatpush2.bf16.msra.mxu0 0
    %717 = vmatprep.subr.bf16.mxu0 0
    %718 = vmatpush2.bf16.msra.mxu0 0
    %719 = vmatprep.subr.bf16.mxu0 0
    %720 = vmatpush2.bf16.msra.mxu0 0
    %721 = vmatprep.subr.bf16.mxu0 0
    %722 = vmatpush2.bf16.msra.mxu0 0
    %723 = vmatprep.subr.bf16.mxu0 0
    %724 = vmatpush2.bf16.msra.mxu0 0
    %725 = vmatprep.mubr.bf16.mxu0 0
    %726 = vmatmul.mubr.bf16.gmra.mxu0 %v691
    %v727 = vpop.f32.mrf.mxu0
    %v728 = vadd.f32 0.0, %v727
    %v729 = vpop.f32.mrf.mxu0
    %v730 = vadd.f32 0.0, %v729
    %v731 = vpop.f32.mrf.mxu0
    %v732 = vpop.f32.mrf.mxu0
    %733 = vdwg.mxu0
    %v734 = vadd.f32 %v684, %v728
    %v735 = vadd.f32 %v685, %v730
    %v736 = vtanh.pop %v734
    %v737 = vtanh.pop %v735
    %v738 = vmul.f32 %v736, 0.5
    %v739 = vmul.f32 %v737, 0.5
    %v740 = vadd.f32 %v738, 0.5
    %v741 = vadd.f32 %v739, 0.5
    %v742 = vsel %vm83, %v736, %v740
    %v743 = vsel %vm84, %v737, %v741
    %v744 = vmul.f32 %v742, %v681
    %v745 = vmul.f32 %v742, %v743
    %747 = vrot.lane.b32.xlu0 %v745, 64
    %v748 = vpop.permute.xlu0 %747
    %v750 = vadd.f32 %v744, %v748
    %v751 = vtanh.pop %v750
    %v752 = vmul.f32 %v743, %v751
    %v753 = vsel %vm104, %v395, %v381
    %v754 = vsel %vm105, %v397, %v383
    %v755 = vpack.c.bf16 %v752, %v752
    %757 = vrot.lane.b32.xlu0 %v755, 64
    %v758 = vpop.permute.xlu0 %757
    %v760 = vsel %vm482, %v758, 0
    %762 = vmatprep.subr.bf16.mxu0 0
    %763 = vmatpush1.bf16.msra.mxu0 0
    %764 = vmatprep.subr.bf16.mxu0 0
    %765 = vmatpush1.bf16.msra.mxu0 0
    %766 = vmatprep.subr.bf16.mxu0 0
    %767 = vmatpush1.bf16.msra.mxu0 0
    %768 = vmatprep.subr.bf16.mxu0 0
    %769 = vmatpush1.bf16.msra.mxu0 0
    %770 = vmatprep.subr.bf16.mxu0 %v473
    %771 = vmatpush1.bf16.msra.mxu0 %v472
    %772 = vmatprep.subr.bf16.mxu0 %v471
    %773 = vmatpush1.bf16.msra.mxu0 %v470
    %774 = vmatprep.subr.bf16.mxu0 %v469
    %775 = vmatpush1.bf16.msra.mxu0 %v468
    %776 = vmatprep.subr.bf16.mxu0 %v467
    %777 = vmatpush1.bf16.msra.mxu0 %v466
    %778 = vmatprep.subr.bf16.mxu0 0
    %779 = vmatpush2.bf16.msra.mxu0 0
    %780 = vmatprep.subr.bf16.mxu0 0
    %781 = vmatpush2.bf16.msra.mxu0 0
    %782 = vmatprep.subr.bf16.mxu0 0
    %783 = vmatpush2.bf16.msra.mxu0 0
    %784 = vmatprep.subr.bf16.mxu0 0
    %785 = vmatpush2.bf16.msra.mxu0 0
    %786 = vmatprep.subr.bf16.mxu0 0
    %787 = vmatpush2.bf16.msra.mxu0 0
    %788 = vmatprep.subr.bf16.mxu0 0
    %789 = vmatpush2.bf16.msra.mxu0 0
    %790 = vmatprep.subr.bf16.mxu0 0
    %791 = vmatpush2.bf16.msra.mxu0 0
    %792 = vmatprep.subr.bf16.mxu0 0
    %793 = vmatpush2.bf16.msra.mxu0 0
    %794 = vmatprep.mubr.bf16.mxu0 0
    %795 = vmatmul.mubr.bf16.gmra.mxu0 %v760
    %v796 = vpop.f32.mrf.mxu0
    %v797 = vadd.f32 0.0, %v796
    %v798 = vpop.f32.mrf.mxu0
    %v799 = vadd.f32 0.0, %v798
    %v800 = vpop.f32.mrf.mxu0
    %v801 = vpop.f32.mrf.mxu0
    %802 = vdwg.mxu0
    %v803 = vadd.f32 %v753, %v797
    %v804 = vadd.f32 %v754, %v799
    %v805 = vtanh.pop %v803
    %v806 = vtanh.pop %v804
    %v807 = vmul.f32 %v805, 0.5
    %v808 = vmul.f32 %v806, 0.5
    %v809 = vadd.f32 %v807, 0.5
    %v810 = vadd.f32 %v808, 0.5
    %v811 = vsel %vm83, %v805, %v809
    %v812 = vsel %vm84, %v806, %v810
    %v813 = vmul.f32 %v811, %v750
    %v814 = vmul.f32 %v811, %v812
    %816 = vrot.lane.b32.xlu0 %v814, 64
    %v817 = vpop.permute.xlu0 %816
    %v819 = vadd.f32 %v813, %v817
    %v820 = vtanh.pop %v819
    %v821 = vmul.f32 %v812, %v820
    %v822 = vsel %vm104, %v401, %v375
    %v823 = vsel %vm105, %v403, %v377
    %v824 = vpack.c.bf16 %v821, %v821
    %826 = vrot.lane.b32.xlu0 %v824, 64
    %v827 = vpop.permute.xlu0 %826
    %v829 = vsel %vm482, %v827, 0
    %831 = vmatprep.subr.bf16.mxu0 0
    %832 = vmatpush1.bf16.msra.mxu0 0
    %833 = vmatprep.subr.bf16.mxu0 0
    %834 = vmatpush1.bf16.msra.mxu0 0
    %835 = vmatprep.subr.bf16.mxu0 0
    %836 = vmatpush1.bf16.msra.mxu0 0
    %837 = vmatprep.subr.bf16.mxu0 0
    %838 = vmatpush1.bf16.msra.mxu0 0
    %839 = vmatprep.subr.bf16.mxu0 %v473
    %840 = vmatpush1.bf16.msra.mxu0 %v472
    %841 = vmatprep.subr.bf16.mxu0 %v471
    %842 = vmatpush1.bf16.msra.mxu0 %v470
    %843 = vmatprep.subr.bf16.mxu0 %v469
    %844 = vmatpush1.bf16.msra.mxu0 %v468
    %845 = vmatprep.subr.bf16.mxu0 %v467
    %846 = vmatpush1.bf16.msra.mxu0 %v466
    %847 = vmatprep.subr.bf16.mxu0 0
    %848 = vmatpush2.bf16.msra.mxu0 0
    %849 = vmatprep.subr.bf16.mxu0 0
    %850 = vmatpush2.bf16.msra.mxu0 0
    %851 = vmatprep.subr.bf16.mxu0 0
    %852 = vmatpush2.bf16.msra.mxu0 0
    %853 = vmatprep.subr.bf16.mxu0 0
    %854 = vmatpush2.bf16.msra.mxu0 0
    %855 = vmatprep.subr.bf16.mxu0 0
    %856 = vmatpush2.bf16.msra.mxu0 0
    %857 = vmatprep.subr.bf16.mxu0 0
    %858 = vmatpush2.bf16.msra.mxu0 0
    %859 = vmatprep.subr.bf16.mxu0 0
    %860 = vmatpush2.bf16.msra.mxu0 0
    %861 = vmatprep.subr.bf16.mxu0 0
    %862 = vmatpush2.bf16.msra.mxu0 0
    %863 = vmatprep.mubr.bf16.mxu0 0
    %864 = vmatmul.mubr.bf16.gmra.mxu0 %v829
    %v865 = vpop.f32.mrf.mxu0
    %v866 = vadd.f32 0.0, %v865
    %v867 = vpop.f32.mrf.mxu0
    %v868 = vadd.f32 0.0, %v867
    %v869 = vpop.f32.mrf.mxu0
    %v870 = vpop.f32.mrf.mxu0
    %871 = vdwg.mxu0
    %v872 = vadd.f32 %v822, %v866
    %v873 = vadd.f32 %v823, %v868
    %v874 = vtanh.pop %v872
    %v875 = vtanh.pop %v873
    %v876 = vmul.f32 %v874, 0.5
    %v877 = vmul.f32 %v875, 0.5
    %v878 = vadd.f32 %v876, 0.5
    %v879 = vadd.f32 %v877, 0.5
    %v880 = vsel %vm83, %v874, %v878
    %v881 = vsel %vm84, %v875, %v879
    %v882 = vmul.f32 %v880, %v819
    %v883 = vmul.f32 %v880, %v881
    %885 = vrot.lane.b32.xlu0 %v883, 64
    %v886 = vpop.permute.xlu0 %885
    %v888 = vadd.f32 %v882, %v886
    %v889 = vtanh.pop %v888
    %v890 = vmul.f32 %v881, %v889
    %v891 = vsel %vm104, %v405, %v371
    %v892 = vsel %vm105, %v407, %v373
    %v893 = vpack.c.bf16 %v890, %v890
    %895 = vrot.lane.b32.xlu0 %v893, 64
    %v896 = vpop.permute.xlu0 %895
    %v898 = vsel %vm482, %v896, 0
    %900 = vmatprep.subr.bf16.mxu0 0
    %901 = vmatpush1.bf16.msra.mxu0 0
    %902 = vmatprep.subr.bf16.mxu0 0
    %903 = vmatpush1.bf16.msra.mxu0 0
    %904 = vmatprep.subr.bf16.mxu0 0
    %905 = vmatpush1.bf16.msra.mxu0 0
    %906 = vmatprep.subr.bf16.mxu0 0
    %907 = vmatpush1.bf16.msra.mxu0 0
    %908 = vmatprep.subr.bf16.mxu0 %v473
    %909 = vmatpush1.bf16.msra.mxu0 %v472
    %910 = vmatprep.subr.bf16.mxu0 %v471
    %911 = vmatpush1.bf16.msra.mxu0 %v470
    %912 = vmatprep.subr.bf16.mxu0 %v469
    %913 = vmatpush1.bf16.msra.mxu0 %v468
    %914 = vmatprep.subr.bf16.mxu0 %v467
    %915 = vmatpush1.bf16.msra.mxu0 %v466
    %916 = vmatprep.subr.bf16.mxu0 0
    %917 = vmatpush2.bf16.msra.mxu0 0
    %918 = vmatprep.subr.bf16.mxu0 0
    %919 = vmatpush2.bf16.msra.mxu0 0
    %920 = vmatprep.subr.bf16.mxu0 0
    %921 = vmatpush2.bf16.msra.mxu0 0
    %922 = vmatprep.subr.bf16.mxu0 0
    %923 = vmatpush2.bf16.msra.mxu0 0
    %924 = vmatprep.subr.bf16.mxu0 0
    %925 = vmatpush2.bf16.msra.mxu0 0
    %926 = vmatprep.subr.bf16.mxu0 0
    %927 = vmatpush2.bf16.msra.mxu0 0
    %928 = vmatprep.subr.bf16.mxu0 0
    %929 = vmatpush2.bf16.msra.mxu0 0
    %930 = vmatprep.subr.bf16.mxu0 0
    %931 = vmatpush2.bf16.msra.mxu0 0
    %932 = vmatprep.mubr.bf16.mxu0 0
    %933 = vmatmul.mubr.bf16.gmra.mxu0 %v898
    %v934 = vpop.f32.mrf.mxu0
    %v935 = vadd.f32 0.0, %v934
    %v936 = vpop.f32.mrf.mxu0
    %v937 = vadd.f32 0.0, %v936
    %v938 = vpop.f32.mrf.mxu0
    %v939 = vpop.f32.mrf.mxu0
    %940 = vdwg.mxu0
    %v941 = vadd.f32 %v891, %v935
    %v942 = vadd.f32 %v892, %v937
    %v943 = vtanh.pop %v941
    %v944 = vtanh.pop %v942
    %v945 = vmul.f32 %v943, 0.5
    %v946 = vmul.f32 %v944, 0.5
    %v947 = vadd.f32 %v945, 0.5
    %v948 = vadd.f32 %v946, 0.5
    %v949 = vsel %vm83, %v943, %v947
    %v950 = vsel %vm84, %v944, %v948
    %v951 = vmul.f32 %v949, %v888
    %v952 = vmul.f32 %v949, %v950
    %954 = vrot.lane.b32.xlu0 %v952, 64
    %v955 = vpop.permute.xlu0 %954
    %v957 = vadd.f32 %v951, %v955
    %v958 = vtanh.pop %v957
    %v959 = vmul.f32 %v950, %v958
    %961 = vrot.lane.b32.xlu0 %v435, 64
    %v962 = vpop.permute.xlu0 %961
    %965 = vrot.lane.b32.xlu0 %v959, 64
    %v966 = vpop.permute.xlu0 %965
    %v968 = vsel %vm85, %v962, %v966
    %970 = vrot.lane.b32.xlu0 %v545, 64
    %v971 = vpop.permute.xlu0 %970
    %974 = vrot.lane.b32.xlu0 %v890, 64
    %v975 = vpop.permute.xlu0 %974
    %v977 = vsel %vm85, %v971, %v975
    %979 = vrot.lane.b32.xlu0 %v614, 64
    %v980 = vpop.permute.xlu0 %979
    %983 = vrot.lane.b32.xlu0 %v821, 64
    %v984 = vpop.permute.xlu0 %983
    %v986 = vsel %vm85, %v980, %v984
    %988 = vrot.lane.b32.xlu0 %v683, 64
    %v989 = vpop.permute.xlu0 %988
    %992 = vrot.lane.b32.xlu0 %v752, 64
    %v993 = vpop.permute.xlu0 %992
    %v995 = vsel %vm85, %v989, %v993
    %v996 = vsel %vm85, %v993, %v989
    %v997 = vsel %vm85, %v984, %v980
    %v998 = vsel %vm85, %v975, %v971
    %v999 = vsel %vm85, %v966, %v962
    %v1000 = vpack.c.bf16 %v977, %v968
    %v1001 = vpack.c.bf16 %v995, %v986
    %v1002 = vpack.c.bf16 %v997, %v996
    %v1003 = vpack.c.bf16 %v999, %v998
    %v1004 = vld [vmem:[%s5] sm:$0xff]
    %v1005 = vld [vmem:[%s5 + $0x8] sm:$0xff]
    %v1006 = vld [vmem:[%s5 + $0x10] sm:$0xff]
    %v1007 = vld [vmem:[%s5 + $0x18] sm:$0xff]
    %v1008 = vld [vmem:[%s5 + $0x20] sm:$0xff]
    %v1009 = vld [vmem:[%s5 + $0x28] sm:$0xff]
    %v1010 = vld [vmem:[%s5 + $0x30] sm:$0xff]
    %v1011 = vld [vmem:[%s5 + $0x38] sm:$0xff]
    %v1012 = vld [vmem:[#allocation6] sm:$0x3]
    %v1014 = vlaneseq
    %v1015 = vshrl.u32 %v1014, 7
    %v1016 = vsub.s32 0, %v1015
    %v1017 = vrot.slane %v1012, %v1016
    %v1018 = vlaneseq
    %v1019 = vshrl.u32 %v1018, 7
    %v1020 = vsub.s32 1, %v1019
    %v1021 = vrot.slane %v1012, %v1020
    %v1032 = vunpack.c.l.b16 %v1004
    %v1033 = vunpack.c.h.b16 %v1004
    %v1034 = vunpack.c.l.b16 %v1005
    %v1035 = vunpack.c.h.b16 %v1005
    %v1036 = vunpack.c.l.b16 %v1006
    %v1037 = vunpack.c.h.b16 %v1006
    %v1038 = vunpack.c.l.b16 %v1007
    %v1039 = vunpack.c.h.b16 %v1007
    %v1040 = vunpack.c.l.b16 %v1008
    %v1041 = vunpack.c.h.b16 %v1008
    %v1042 = vunpack.c.l.b16 %v1009
    %v1043 = vunpack.c.h.b16 %v1009
    %v1044 = vunpack.c.l.b16 %v1010
    %v1045 = vunpack.c.h.b16 %v1010
    %v1046 = vunpack.c.l.b16 %v1011
    %v1047 = vunpack.c.h.b16 %v1011
    %v1048 = vpack.c.b16 %v1034, %v1032
    %v1049 = vpack.c.b16 %v1035, %v1033
    %v1050 = vpack.c.b16 %v1038, %v1036
    %v1051 = vpack.c.b16 %v1039, %v1037
    %v1052 = vpack.c.b16 %v1042, %v1040
    %v1053 = vpack.c.b16 %v1043, %v1041
    %v1054 = vpack.c.b16 %v1046, %v1044
    %v1055 = vpack.c.b16 %v1047, %v1045
    %v1065 = vsel %vm482, %v1000, 0
    %v1068 = vsel %vm482, %v1001, 0
    %v1071 = vsel %vm482, %v1002, 0
    %v1074 = vsel %vm482, %v1003, 0
    %1076 = vmatprep.subr.bf16.mxu0 0
    %1077 = vmatpush1.bf16.msra.mxu0 0
    %1078 = vmatprep.subr.bf16.mxu0 0
    %1079 = vmatpush1.bf16.msra.mxu0 0
    %1080 = vmatprep.subr.bf16.mxu0 0
    %1081 = vmatpush1.bf16.msra.mxu0 0
    %1082 = vmatprep.subr.bf16.mxu0 0
    %1083 = vmatpush1.bf16.msra.mxu0 0
    %1084 = vmatprep.subr.bf16.mxu0 %v1055
    %1085 = vmatpush1.bf16.msra.mxu0 %v1054
    %1086 = vmatprep.subr.bf16.mxu0 %v1053
    %1087 = vmatpush1.bf16.msra.mxu0 %v1052
    %1088 = vmatprep.subr.bf16.mxu0 %v1051
    %1089 = vmatpush1.bf16.msra.mxu0 %v1050
    %1090 = vmatprep.subr.bf16.mxu0 %v1049
    %1091 = vmatpush1.bf16.msra.mxu0 %v1048
    %1092 = vmatprep.subr.bf16.mxu0 0
    %1093 = vmatpush2.bf16.msra.mxu0 0
    %1094 = vmatprep.subr.bf16.mxu0 0
    %1095 = vmatpush2.bf16.msra.mxu0 0
    %1096 = vmatprep.subr.bf16.mxu0 0
    %1097 = vmatpush2.bf16.msra.mxu0 0
    %1098 = vmatprep.subr.bf16.mxu0 0
    %1099 = vmatpush2.bf16.msra.mxu0 0
    %1100 = vmatprep.subr.bf16.mxu0 0
    %1101 = vmatpush2.bf16.msra.mxu0 0
    %1102 = vmatprep.subr.bf16.mxu0 0
    %1103 = vmatpush2.bf16.msra.mxu0 0
    %1104 = vmatprep.subr.bf16.mxu0 0
    %1105 = vmatpush2.bf16.msra.mxu0 0
    %1106 = vmatprep.subr.bf16.mxu0 0
    %1107 = vmatpush2.bf16.msra.mxu0 0
    %1108 = vmatprep.mubr.bf16.mxu0 0
    %1109 = vmatmul.mubr.bf16.gmra.mxu0 %v1065
    %v1110 = vpop.f32.mrf.mxu0
    %v1111 = vadd.f32 %v1017, %v1110
    %v1112 = vpop.f32.mrf.mxu0
    %v1113 = vpop.f32.mrf.mxu0
    %v1114 = vadd.f32 %v1017, %v1113
    %v1115 = vpop.f32.mrf.mxu0
    %1116 = vmatprep.mubr.bf16.mxu0 0
    %1117 = vmatmul.mubr.bf16.gmra.mxu0 %v1068
    %v1118 = vpop.f32.mrf.mxu0
    %v1119 = vadd.f32 %v1017, %v1118
    %v1120 = vpop.f32.mrf.mxu0
    %v1121 = vpop.f32.mrf.mxu0
    %v1122 = vadd.f32 %v1017, %v1121
    %v1123 = vpop.f32.mrf.mxu0
    %1124 = vmatprep.mubr.bf16.mxu0 0
    %1125 = vmatmul.mubr.bf16.gmra.mxu0 %v1071
    %v1126 = vpop.f32.mrf.mxu0
    %v1127 = vadd.f32 %v1017, %v1126
    %v1128 = vpop.f32.mrf.mxu0
    %v1129 = vpop.f32.mrf.mxu0
    %v1130 = vadd.f32 %v1017, %v1129
    %v1131 = vpop.f32.mrf.mxu0
    %1132 = vmatprep.mubr.bf16.mxu0 0
    %1133 = vmatmul.mubr.bf16.gmra.mxu0 %v1074
    %v1134 = vpop.f32.mrf.mxu0
    %v1135 = vadd.f32 %v1017, %v1134
    %v1136 = vpop.f32.mrf.mxu0
    %v1137 = vpop.f32.mrf.mxu0
    %v1138 = vadd.f32 %v1017, %v1137
    %v1139 = vpop.f32.mrf.mxu0
    %v1140 = vadd.f32 %v1021, %v1139
    %1141 = vdwg.mxu0
    %v1142 = vld [vmem:[#allocation4] sm:$0xf]
    %v1143 = vld [vmem:[#allocation4 + $0x4] sm:$0xf]
    %v1144 = vld [vmem:[#allocation4 + $0x8] sm:$0xf]
    %v1145 = vld [vmem:[#allocation4 + $0xc] sm:$0xf]
    %v1146 = vtanh.pop %v1111
    %v1147 = vmul.f32 %v1146, 0.5
    %v1148 = vadd.f32 %v1147, 0.5
    %v1149 = vsel %vm77, %v1146, %v1148
    %v1150 = vmul.f32 %v1149, 0.0
    %1152 = vrot.lane.b32.xlu0 %v1149, 64
    %v1153 = vpop.permute.xlu0 %1152
    %v1155 = vmul.f32 %v1149, %v1153
    %1157 = vrot.lane.b32.xlu0 %v1155, 32
    %v1158 = vpop.permute.xlu0 %1157
    %v1160 = vadd.f32 %v1150, %v1158
    %v1161 = vtanh.pop %v1160
    %1163 = vrot.lane.b32.xlu0 %v1161, 64
    %v1164 = vpop.permute.xlu0 %1163
    %v1166 = vmul.f32 %v1149, %v1164
    %v1167 = vpack.c.bf16 %v1166, %v1166
    %1169 = vrot.lane.b32.xlu0 %v1167, 32
    %v1170 = vpop.permute.xlu0 %1169
    %v1175 = vunpack.c.l.b16 %v1142
    %v1176 = vunpack.c.l.b16 %v1143
    %v1177 = vunpack.c.l.b16 %v1144
    %v1178 = vunpack.c.l.b16 %v1145
    %v1179 = vpack.c.b16 %v1176, %v1175
    %v1180 = vpack.c.b16 %v1178, %v1177
    %vm1183 = vcmask 261120
    %v1185 = vsel %vm1183, %v1170, 0
    %1187 = vmatprep.subr.bf16.mxu0 0
    %1188 = vmatpush1.bf16.msra.mxu0 0
    %1189 = vmatprep.subr.bf16.mxu0 0
    %1190 = vmatpush1.bf16.msra.mxu0 0
    %1191 = vmatprep.subr.bf16.mxu0 0
    %1192 = vmatpush1.bf16.msra.mxu0 0
    %1193 = vmatprep.subr.bf16.mxu0 0
    %1194 = vmatpush1.bf16.msra.mxu0 0
    %1195 = vmatprep.subr.bf16.mxu0 0
    %1196 = vmatpush1.bf16.msra.mxu0 0
    %1197 = vmatprep.subr.bf16.mxu0 0
    %1198 = vmatpush1.bf16.msra.mxu0 0
    %1199 = vmatprep.subr.bf16.mxu0 0
    %1200 = vmatpush1.bf16.msra.mxu0 %v1180
    %1201 = vmatprep.subr.bf16.mxu0 0
    %1202 = vmatpush1.bf16.msra.mxu0 %v1179
    %1203 = vmatprep.subr.bf16.mxu0 0
    %1204 = vmatpush2.bf16.msra.mxu0 0
    %1205 = vmatprep.subr.bf16.mxu0 0
    %1206 = vmatpush2.bf16.msra.mxu0 0
    %1207 = vmatprep.subr.bf16.mxu0 0
    %1208 = vmatpush2.bf16.msra.mxu0 0
    %1209 = vmatprep.subr.bf16.mxu0 0
    %1210 = vmatpush2.bf16.msra.mxu0 0
    %1211 = vmatprep.subr.bf16.mxu0 0
    %1212 = vmatpush2.bf16.msra.mxu0 0
    %1213 = vmatprep.subr.bf16.mxu0 0
    %1214 = vmatpush2.bf16.msra.mxu0 0
    %1215 = vmatprep.subr.bf16.mxu0 0
    %1216 = vmatpush2.bf16.msra.mxu0 0
    %1217 = vmatprep.subr.bf16.mxu0 0
    %1218 = vmatpush2.bf16.msra.mxu0 0
    %1219 = vmatprep.mubr.bf16.mxu0 0
    %1220 = vmatmul.mubr.bf16.gmra.mxu0 %v1185
    %v1221 = vpop.f32.mrf.mxu0
    %v1222 = vadd.f32 0.0, %v1221
    %v1223 = vpop.f32.mrf.mxu0
    %v1224 = vpop.f32.mrf.mxu0
    %v1225 = vpop.f32.mrf.mxu0
    %1226 = vdwg.mxu0
    %v1227 = vadd.f32 %v1114, %v1222
    %v1228 = vtanh.pop %v1227
    %v1229 = vmul.f32 %v1228, 0.5
    %v1230 = vadd.f32 %v1229, 0.5
    %v1231 = vsel %vm77, %v1228, %v1230
    %v1232 = vmul.f32 %v1231, %v1160
    %1234 = vrot.lane.b32.xlu0 %v1231, 64
    %v1235 = vpop.permute.xlu0 %1234
    %v1237 = vmul.f32 %v1231, %v1235
    %1239 = vrot.lane.b32.xlu0 %v1237, 32
    %v1240 = vpop.permute.xlu0 %1239
    %v1242 = vadd.f32 %v1232, %v1240
    %v1243 = vtanh.pop %v1242
    %1245 = vrot.lane.b32.xlu0 %v1243, 64
    %v1246 = vpop.permute.xlu0 %1245
    %v1248 = vmul.f32 %v1231, %v1246
    %v1249 = vpack.c.bf16 %v1248, %v1248
    %1251 = vrot.lane.b32.xlu0 %v1249, 32
    %v1252 = vpop.permute.xlu0 %1251
    %v1254 = vsel %vm1183, %v1252, 0
    %1256 = vmatprep.subr.bf16.mxu0 0
    %1257 = vmatpush1.bf16.msra.mxu0 0
    %1258 = vmatprep.subr.bf16.mxu0 0
    %1259 = vmatpush1.bf16.msra.mxu0 0
    %1260 = vmatprep.subr.bf16.mxu0 0
    %1261 = vmatpush1.bf16.msra.mxu0 0
    %1262 = vmatprep.subr.bf16.mxu0 0
    %1263 = vmatpush1.bf16.msra.mxu0 0
    %1264 = vmatprep.subr.bf16.mxu0 0
    %1265 = vmatpush1.bf16.msra.mxu0 0
    %1266 = vmatprep.subr.bf16.mxu0 0
    %1267 = vmatpush1.bf16.msra.mxu0 0
    %1268 = vmatprep.subr.bf16.mxu0 0
    %1269 = vmatpush1.bf16.msra.mxu0 %v1180
    %1270 = vmatprep.subr.bf16.mxu0 0
    %1271 = vmatpush1.bf16.msra.mxu0 %v1179
    %1272 = vmatprep.subr.bf16.mxu0 0
    %1273 = vmatpush2.bf16.msra.mxu0 0
    %1274 = vmatprep.subr.bf16.mxu0 0
    %1275 = vmatpush2.bf16.msra.mxu0 0
    %1276 = vmatprep.subr.bf16.mxu0 0
    %1277 = vmatpush2.bf16.msra.mxu0 0
    %1278 = vmatprep.subr.bf16.mxu0 0
    %1279 = vmatpush2.bf16.msra.mxu0 0
    %1280 = vmatprep.subr.bf16.mxu0 0
    %1281 = vmatpush2.bf16.msra.mxu0 0
    %1282 = vmatprep.subr.bf16.mxu0 0
    %1283 = vmatpush2.bf16.msra.mxu0 0
    %1284 = vmatprep.subr.bf16.mxu0 0
    %1285 = vmatpush2.bf16.msra.mxu0 0
    %1286 = vmatprep.subr.bf16.mxu0 0
    %1287 = vmatpush2.bf16.msra.mxu0 0
    %1288 = vmatprep.mubr.bf16.mxu0 0
    %1289 = vmatmul.mubr.bf16.gmra.mxu0 %v1254
    %v1290 = vpop.f32.mrf.mxu0
    %v1291 = vadd.f32 0.0, %v1290
    %v1292 = vpop.f32.mrf.mxu0
    %v1293 = vpop.f32.mrf.mxu0
    %v1294 = vpop.f32.mrf.mxu0
    %1295 = vdwg.mxu0
    %v1296 = vadd.f32 %v1119, %v1291
    %v1297 = vtanh.pop %v1296
    %v1298 = vmul.f32 %v1297, 0.5
    %v1299 = vadd.f32 %v1298, 0.5
    %v1300 = vsel %vm77, %v1297, %v1299
    %v1301 = vmul.f32 %v1300, %v1242
    %1303 = vrot.lane.b32.xlu0 %v1300, 64
    %v1304 = vpop.permute.xlu0 %1303
    %v1306 = vmul.f32 %v1300, %v1304
    %1308 = vrot.lane.b32.xlu0 %v1306, 32
    %v1309 = vpop.permute.xlu0 %1308
    %v1311 = vadd.f32 %v1301, %v1309
    %v1312 = vtanh.pop %v1311
    %1314 = vrot.lane.b32.xlu0 %v1312, 64
    %v1315 = vpop.permute.xlu0 %1314
    %v1317 = vmul.f32 %v1300, %v1315
    %v1318 = vpack.c.bf16 %v1317, %v1317
    %1320 = vrot.lane.b32.xlu0 %v1318, 32
    %v1321 = vpop.permute.xlu0 %1320
    %v1323 = vsel %vm1183, %v1321, 0
    %1325 = vmatprep.subr.bf16.mxu0 0
    %1326 = vmatpush1.bf16.msra.mxu0 0
    %1327 = vmatprep.subr.bf16.mxu0 0
    %1328 = vmatpush1.bf16.msra.mxu0 0
    %1329 = vmatprep.subr.bf16.mxu0 0
    %1330 = vmatpush1.bf16.msra.mxu0 0
    %1331 = vmatprep.subr.bf16.mxu0 0
    %1332 = vmatpush1.bf16.msra.mxu0 0
    %1333 = vmatprep.subr.bf16.mxu0 0
    %1334 = vmatpush1.bf16.msra.mxu0 0
    %1335 = vmatprep.subr.bf16.mxu0 0
    %1336 = vmatpush1.bf16.msra.mxu0 0
    %1337 = vmatprep.subr.bf16.mxu0 0
    %1338 = vmatpush1.bf16.msra.mxu0 %v1180
    %1339 = vmatprep.subr.bf16.mxu0 0
    %1340 = vmatpush1.bf16.msra.mxu0 %v1179
    %1341 = vmatprep.subr.bf16.mxu0 0
    %1342 = vmatpush2.bf16.msra.mxu0 0
    %1343 = vmatprep.subr.bf16.mxu0 0
    %1344 = vmatpush2.bf16.msra.mxu0 0
    %1345 = vmatprep.subr.bf16.mxu0 0
    %1346 = vmatpush2.bf16.msra.mxu0 0
    %1347 = vmatprep.subr.bf16.mxu0 0
    %1348 = vmatpush2.bf16.msra.mxu0 0
    %1349 = vmatprep.subr.bf16.mxu0 0
    %1350 = vmatpush2.bf16.msra.mxu0 0
    %1351 = vmatprep.subr.bf16.mxu0 0
    %1352 = vmatpush2.bf16.msra.mxu0 0
    %1353 = vmatprep.subr.bf16.mxu0 0
    %1354 = vmatpush2.bf16.msra.mxu0 0
    %1355 = vmatprep.subr.bf16.mxu0 0
    %1356 = vmatpush2.bf16.msra.mxu0 0
    %1357 = vmatprep.mubr.bf16.mxu0 0
    %1358 = vmatmul.mubr.bf16.gmra.mxu0 %v1323
    %v1359 = vpop.f32.mrf.mxu0
    %v1360 = vadd.f32 0.0, %v1359
    %v1361 = vpop.f32.mrf.mxu0
    %v1362 = vpop.f32.mrf.mxu0
    %v1363 = vpop.f32.mrf.mxu0
    %1364 = vdwg.mxu0
    %v1365 = vadd.f32 %v1122, %v1360
    %v1366 = vtanh.pop %v1365
    %v1367 = vmul.f32 %v1366, 0.5
    %v1368 = vadd.f32 %v1367, 0.5
    %v1369 = vsel %vm77, %v1366, %v1368
    %v1370 = vmul.f32 %v1369, %v1311
    %1372 = vrot.lane.b32.xlu0 %v1369, 64
    %v1373 = vpop.permute.xlu0 %1372
    %v1375 = vmul.f32 %v1369, %v1373
    %1377 = vrot.lane.b32.xlu0 %v1375, 32
    %v1378 = vpop.permute.xlu0 %1377
    %v1380 = vadd.f32 %v1370, %v1378
    %v1381 = vtanh.pop %v1380
    %1383 = vrot.lane.b32.xlu0 %v1381, 64
    %v1384 = vpop.permute.xlu0 %1383
    %v1386 = vmul.f32 %v1369, %v1384
    %v1387 = vpack.c.bf16 %v1386, %v1386
    %1389 = vrot.lane.b32.xlu0 %v1387, 32
    %v1390 = vpop.permute.xlu0 %1389
    %v1392 = vsel %vm1183, %v1390, 0
    %1394 = vmatprep.subr.bf16.mxu0 0
    %1395 = vmatpush1.bf16.msra.mxu0 0
    %1396 = vmatprep.subr.bf16.mxu0 0
    %1397 = vmatpush1.bf16.msra.mxu0 0
    %1398 = vmatprep.subr.bf16.mxu0 0
    %1399 = vmatpush1.bf16.msra.mxu0 0
    %1400 = vmatprep.subr.bf16.mxu0 0
    %1401 = vmatpush1.bf16.msra.mxu0 0
    %1402 = vmatprep.subr.bf16.mxu0 0
    %1403 = vmatpush1.bf16.msra.mxu0 0
    %1404 = vmatprep.subr.bf16.mxu0 0
    %1405 = vmatpush1.bf16.msra.mxu0 0
    %1406 = vmatprep.subr.bf16.mxu0 0
    %1407 = vmatpush1.bf16.msra.mxu0 %v1180
    %1408 = vmatprep.subr.bf16.mxu0 0
    %1409 = vmatpush1.bf16.msra.mxu0 %v1179
    %1410 = vmatprep.subr.bf16.mxu0 0
    %1411 = vmatpush2.bf16.msra.mxu0 0
    %1412 = vmatprep.subr.bf16.mxu0 0
    %1413 = vmatpush2.bf16.msra.mxu0 0
    %1414 = vmatprep.subr.bf16.mxu0 0
    %1415 = vmatpush2.bf16.msra.mxu0 0
    %1416 = vmatprep.subr.bf16.mxu0 0
    %1417 = vmatpush2.bf16.msra.mxu0 0
    %1418 = vmatprep.subr.bf16.mxu0 0
    %1419 = vmatpush2.bf16.msra.mxu0 0
    %1420 = vmatprep.subr.bf16.mxu0 0
    %1421 = vmatpush2.bf16.msra.mxu0 0
    %1422 = vmatprep.subr.bf16.mxu0 0
    %1423 = vmatpush2.bf16.msra.mxu0 0
    %1424 = vmatprep.subr.bf16.mxu0 0
    %1425 = vmatpush2.bf16.msra.mxu0 0
    %1426 = vmatprep.mubr.bf16.mxu0 0
    %1427 = vmatmul.mubr.bf16.gmra.mxu0 %v1392
    %v1428 = vpop.f32.mrf.mxu0
    %v1429 = vadd.f32 0.0, %v1428
    %v1430 = vpop.f32.mrf.mxu0
    %v1431 = vpop.f32.mrf.mxu0
    %v1432 = vpop.f32.mrf.mxu0
    %1433 = vdwg.mxu0
    %v1434 = vadd.f32 %v1127, %v1429
    %v1435 = vtanh.pop %v1434
    %v1436 = vmul.f32 %v1435, 0.5
    %v1437 = vadd.f32 %v1436, 0.5
    %v1438 = vsel %vm77, %v1435, %v1437
    %v1439 = vmul.f32 %v1438, %v1380
    %1441 = vrot.lane.b32.xlu0 %v1438, 64
    %v1442 = vpop.permute.xlu0 %1441
    %v1444 = vmul.f32 %v1438, %v1442
    %1446 = vrot.lane.b32.xlu0 %v1444, 32
    %v1447 = vpop.permute.xlu0 %1446
    %v1449 = vadd.f32 %v1439, %v1447
    %v1450 = vtanh.pop %v1449
    %1452 = vrot.lane.b32.xlu0 %v1450, 64
    %v1453 = vpop.permute.xlu0 %1452
    %v1455 = vmul.f32 %v1438, %v1453
    %v1456 = vpack.c.bf16 %v1455, %v1455
    %1458 = vrot.lane.b32.xlu0 %v1456, 32
    %v1459 = vpop.permute.xlu0 %1458
    %v1461 = vsel %vm1183, %v1459, 0
    %1463 = vmatprep.subr.bf16.mxu0 0
    %1464 = vmatpush1.bf16.msra.mxu0 0
    %1465 = vmatprep.subr.bf16.mxu0 0
    %1466 = vmatpush1.bf16.msra.mxu0 0
    %1467 = vmatprep.subr.bf16.mxu0 0
    %1468 = vmatpush1.bf16.msra.mxu0 0
    %1469 = vmatprep.subr.bf16.mxu0 0
    %1470 = vmatpush1.bf16.msra.mxu0 0
    %1471 = vmatprep.subr.bf16.mxu0 0
    %1472 = vmatpush1.bf16.msra.mxu0 0
    %1473 = vmatprep.subr.bf16.mxu0 0
    %1474 = vmatpush1.bf16.msra.mxu0 0
    %1475 = vmatprep.subr.bf16.mxu0 0
    %1476 = vmatpush1.bf16.msra.mxu0 %v1180
    %1477 = vmatprep.subr.bf16.mxu0 0
    %1478 = vmatpush1.bf16.msra.mxu0 %v1179
    %1479 = vmatprep.subr.bf16.mxu0 0
    %1480 = vmatpush2.bf16.msra.mxu0 0
    %1481 = vmatprep.subr.bf16.mxu0 0
    %1482 = vmatpush2.bf16.msra.mxu0 0
    %1483 = vmatprep.subr.bf16.mxu0 0
    %1484 = vmatpush2.bf16.msra.mxu0 0
    %1485 = vmatprep.subr.bf16.mxu0 0
    %1486 = vmatpush2.bf16.msra.mxu0 0
    %1487 = vmatprep.subr.bf16.mxu0 0
    %1488 = vmatpush2.bf16.msra.mxu0 0
    %1489 = vmatprep.subr.bf16.mxu0 0
    %1490 = vmatpush2.bf16.msra.mxu0 0
    %1491 = vmatprep.subr.bf16.mxu0 0
    %1492 = vmatpush2.bf16.msra.mxu0 0
    %1493 = vmatprep.subr.bf16.mxu0 0
    %1494 = vmatpush2.bf16.msra.mxu0 0
    %1495 = vmatprep.mubr.bf16.mxu0 0
    %1496 = vmatmul.mubr.bf16.gmra.mxu0 %v1461
    %v1497 = vpop.f32.mrf.mxu0
    %v1498 = vadd.f32 0.0, %v1497
    %v1499 = vpop.f32.mrf.mxu0
    %v1500 = vpop.f32.mrf.mxu0
    %v1501 = vpop.f32.mrf.mxu0
    %1502 = vdwg.mxu0
    %v1503 = vadd.f32 %v1130, %v1498
    %v1504 = vtanh.pop %v1503
    %v1505 = vmul.f32 %v1504, 0.5
    %v1506 = vadd.f32 %v1505, 0.5
    %v1507 = vsel %vm77, %v1504, %v1506
    %v1508 = vmul.f32 %v1507, %v1449
    %1510 = vrot.lane.b32.xlu0 %v1507, 64
    %v1511 = vpop.permute.xlu0 %1510
    %v1513 = vmul.f32 %v1507, %v1511
    %1515 = vrot.lane.b32.xlu0 %v1513, 32
    %v1516 = vpop.permute.xlu0 %1515
    %v1518 = vadd.f32 %v1508, %v1516
    %v1519 = vtanh.pop %v1518
    %1521 = vrot.lane.b32.xlu0 %v1519, 64
    %v1522 = vpop.permute.xlu0 %1521
    %v1524 = vmul.f32 %v1507, %v1522
    %v1525 = vpack.c.bf16 %v1524, %v1524
    %1527 = vrot.lane.b32.xlu0 %v1525, 32
    %v1528 = vpop.permute.xlu0 %1527
    %v1530 = vsel %vm1183, %v1528, 0
    %1532 = vmatprep.subr.bf16.mxu0 0
    %1533 = vmatpush1.bf16.msra.mxu0 0
    %1534 = vmatprep.subr.bf16.mxu0 0
    %1535 = vmatpush1.bf16.msra.mxu0 0
    %1536 = vmatprep.subr.bf16.mxu0 0
    %1537 = vmatpush1.bf16.msra.mxu0 0
    %1538 = vmatprep.subr.bf16.mxu0 0
    %1539 = vmatpush1.bf16.msra.mxu0 0
    %1540 = vmatprep.subr.bf16.mxu0 0
    %1541 = vmatpush1.bf16.msra.mxu0 0
    %1542 = vmatprep.subr.bf16.mxu0 0
    %1543 = vmatpush1.bf16.msra.mxu0 0
    %1544 = vmatprep.subr.bf16.mxu0 0
    %1545 = vmatpush1.bf16.msra.mxu0 %v1180
    %1546 = vmatprep.subr.bf16.mxu0 0
    %1547 = vmatpush1.bf16.msra.mxu0 %v1179
    %1548 = vmatprep.subr.bf16.mxu0 0
    %1549 = vmatpush2.bf16.msra.mxu0 0
    %1550 = vmatprep.subr.bf16.mxu0 0
    %1551 = vmatpush2.bf16.msra.mxu0 0
    %1552 = vmatprep.subr.bf16.mxu0 0
    %1553 = vmatpush2.bf16.msra.mxu0 0
    %1554 = vmatprep.subr.bf16.mxu0 0
    %1555 = vmatpush2.bf16.msra.mxu0 0
    %1556 = vmatprep.subr.bf16.mxu0 0
    %1557 = vmatpush2.bf16.msra.mxu0 0
    %1558 = vmatprep.subr.bf16.mxu0 0
    %1559 = vmatpush2.bf16.msra.mxu0 0
    %1560 = vmatprep.subr.bf16.mxu0 0
    %1561 = vmatpush2.bf16.msra.mxu0 0
    %1562 = vmatprep.subr.bf16.mxu0 0
    %1563 = vmatpush2.bf16.msra.mxu0 0
    %1564 = vmatprep.mubr.bf16.mxu0 0
    %1565 = vmatmul.mubr.bf16.gmra.mxu0 %v1530
    %v1566 = vpop.f32.mrf.mxu0
    %v1567 = vadd.f32 0.0, %v1566
    %v1568 = vpop.f32.mrf.mxu0
    %v1569 = vpop.f32.mrf.mxu0
    %v1570 = vpop.f32.mrf.mxu0
    %1571 = vdwg.mxu0
    %v1572 = vadd.f32 %v1135, %v1567
    %v1573 = vtanh.pop %v1572
    %v1574 = vmul.f32 %v1573, 0.5
    %v1575 = vadd.f32 %v1574, 0.5
    %v1576 = vsel %vm77, %v1573, %v1575
    %v1577 = vmul.f32 %v1576, %v1518
    %1579 = vrot.lane.b32.xlu0 %v1576, 64
    %v1580 = vpop.permute.xlu0 %1579
    %v1582 = vmul.f32 %v1576, %v1580
    %1584 = vrot.lane.b32.xlu0 %v1582, 32
    %v1585 = vpop.permute.xlu0 %1584
    %v1587 = vadd.f32 %v1577, %v1585
    %v1588 = vtanh.pop %v1587
    %1590 = vrot.lane.b32.xlu0 %v1588, 64
    %v1591 = vpop.permute.xlu0 %1590
    %v1593 = vmul.f32 %v1576, %v1591
    %v1594 = vpack.c.bf16 %v1593, %v1593
    %1596 = vrot.lane.b32.xlu0 %v1594, 32
    %v1597 = vpop.permute.xlu0 %1596
    %v1599 = vsel %vm1183, %v1597, 0
    %1601 = vmatprep.subr.bf16.mxu0 0
    %1602 = vmatpush1.bf16.msra.mxu0 0
    %1603 = vmatprep.subr.bf16.mxu0 0
    %1604 = vmatpush1.bf16.msra.mxu0 0
    %1605 = vmatprep.subr.bf16.mxu0 0
    %1606 = vmatpush1.bf16.msra.mxu0 0
    %1607 = vmatprep.subr.bf16.mxu0 0
    %1608 = vmatpush1.bf16.msra.mxu0 0
    %1609 = vmatprep.subr.bf16.mxu0 0
    %1610 = vmatpush1.bf16.msra.mxu0 0
    %1611 = vmatprep.subr.bf16.mxu0 0
    %1612 = vmatpush1.bf16.msra.mxu0 0
    %1613 = vmatprep.subr.bf16.mxu0 0
    %1614 = vmatpush1.bf16.msra.mxu0 %v1180
    %1615 = vmatprep.subr.bf16.mxu0 0
    %1616 = vmatpush1.bf16.msra.mxu0 %v1179
    %1617 = vmatprep.subr.bf16.mxu0 0
    %1618 = vmatpush2.bf16.msra.mxu0 0
    %1619 = vmatprep.subr.bf16.mxu0 0
    %1620 = vmatpush2.bf16.msra.mxu0 0
    %1621 = vmatprep.subr.bf16.mxu0 0
    %1622 = vmatpush2.bf16.msra.mxu0 0
    %1623 = vmatprep.subr.bf16.mxu0 0
    %1624 = vmatpush2.bf16.msra.mxu0 0
    %1625 = vmatprep.subr.bf16.mxu0 0
    %1626 = vmatpush2.bf16.msra.mxu0 0
    %1627 = vmatprep.subr.bf16.mxu0 0
    %1628 = vmatpush2.bf16.msra.mxu0 0
    %1629 = vmatprep.subr.bf16.mxu0 0
    %1630 = vmatpush2.bf16.msra.mxu0 0
    %1631 = vmatprep.subr.bf16.mxu0 0
    %1632 = vmatpush2.bf16.msra.mxu0 0
    %1633 = vmatprep.mubr.bf16.mxu0 0
    %1634 = vmatmul.mubr.bf16.gmra.mxu0 %v1599
    %v1635 = vpop.f32.mrf.mxu0
    %v1636 = vadd.f32 0.0, %v1635
    %v1637 = vpop.f32.mrf.mxu0
    %v1638 = vpop.f32.mrf.mxu0
    %v1639 = vpop.f32.mrf.mxu0
    %1640 = vdwg.mxu0
    %v1641 = vadd.f32 %v1138, %v1636
    %v1642 = vtanh.pop %v1641
    %v1643 = vmul.f32 %v1642, 0.5
    %v1644 = vadd.f32 %v1643, 0.5
    %v1645 = vsel %vm77, %v1642, %v1644
    %v1646 = vmul.f32 %v1645, %v1587
    %1648 = vrot.lane.b32.xlu0 %v1645, 64
    %v1649 = vpop.permute.xlu0 %1648
    %v1651 = vmul.f32 %v1645, %v1649
    %1653 = vrot.lane.b32.xlu0 %v1651, 32
    %v1654 = vpop.permute.xlu0 %1653
    %v1656 = vadd.f32 %v1646, %v1654
    %v1657 = vtanh.pop %v1656
    %1659 = vrot.lane.b32.xlu0 %v1657, 64
    %v1660 = vpop.permute.xlu0 %1659
    %v1662 = vmul.f32 %v1645, %v1660
    %v1663 = vtanh.pop %v1140
    %v1664 = vmul.f32 %v1663, 0.5
    %v1665 = vadd.f32 %v1664, 0.5
    %v1666 = vsel %vm77, %v1663, %v1665
    %v1667 = vmul.f32 %v1666, 0.0
    %1669 = vrot.lane.b32.xlu0 %v1666, 64
    %v1670 = vpop.permute.xlu0 %1669
    %v1672 = vmul.f32 %v1666, %v1670
    %1674 = vrot.lane.b32.xlu0 %v1672, 32
    %v1675 = vpop.permute.xlu0 %1674
    %v1677 = vadd.f32 %v1667, %v1675
    %v1678 = vtanh.pop %v1677
    %1680 = vrot.lane.b32.xlu0 %v1678, 64
    %v1681 = vpop.permute.xlu0 %1680
    %v1683 = vmul.f32 %v1666, %v1681
    %1685 = vrot.lane.b32.xlu0 %v1662, 32
    %v1686 = vpop.permute.xlu0 %1685
    %1689 = vrot.lane.b32.xlu0 %v1683, 64
    %v1690 = vpop.permute.xlu0 %1689
    %v1692 = vsel %vm1183, %v1686, %v1690
    %v1693 = vpack.c.bf16 %v1692, %v1692
    %v1694 = vld [vmem:[%s8] sm:$0xf]
    %v1695 = vld [vmem:[%s8 + $0x4] sm:$0xf]
    %v1696 = vld [vmem:[%s8 + $0x8] sm:$0xf]
    %v1697 = vld [vmem:[%s8 + $0xc] sm:$0xf]
    %v1698 = vld [vmem:[%s8 + $0x10] sm:$0xf]
    %v1699 = vld [vmem:[%s8 + $0x14] sm:$0xf]
    %v1700 = vld [vmem:[%s8 + $0x18] sm:$0xf]
    %v1701 = vld [vmem:[%s8 + $0x1c] sm:$0xf]
    %v1702 = vld [vmem:[%s9] sm:$0x1]
    %v1704 = vlaneseq
    %v1705 = vshrl.u32 %v1704, 7
    %v1706 = vsub.s32 0, %v1705
    %v1707 = vrot.slane %v1702, %v1706
    %v1717 = vunpack.c.l.b16 %v1694
    %v1718 = vunpack.c.l.b16 %v1695
    %v1719 = vunpack.c.l.b16 %v1696
    %v1720 = vunpack.c.l.b16 %v1697
    %v1721 = vunpack.c.l.b16 %v1698
    %v1722 = vunpack.c.l.b16 %v1699
    %v1723 = vunpack.c.l.b16 %v1700
    %v1724 = vunpack.c.l.b16 %v1701
    %v1725 = vpack.c.b16 %v1718, %v1717
    %v1726 = vpack.c.b16 %v1720, %v1719
    %v1727 = vpack.c.b16 %v1722, %v1721
    %v1728 = vpack.c.b16 %v1724, %v1723
    %v1734 = vsel %vm482, %v1693, 0
    %1736 = vmatprep.subr.bf16.mxu0 0
    %1737 = vmatpush1.bf16.msra.mxu0 0
    %1738 = vmatprep.subr.bf16.mxu0 0
    %1739 = vmatpush1.bf16.msra.mxu0 0
    %1740 = vmatprep.subr.bf16.mxu0 0
    %1741 = vmatpush1.bf16.msra.mxu0 0
    %1742 = vmatprep.subr.bf16.mxu0 0
    %1743 = vmatpush1.bf16.msra.mxu0 0
    %1744 = vmatprep.subr.bf16.mxu0 0
    %1745 = vmatpush1.bf16.msra.mxu0 %v1728
    %1746 = vmatprep.subr.bf16.mxu0 0
    %1747 = vmatpush1.bf16.msra.mxu0 %v1727
    %1748 = vmatprep.subr.bf16.mxu0 0
    %1749 = vmatpush1.bf16.msra.mxu0 %v1726
    %1750 = vmatprep.subr.bf16.mxu0 0
    %1751 = vmatpush1.bf16.msra.mxu0 %v1725
    %1752 = vmatprep.subr.bf16.mxu0 0
    %1753 = vmatpush2.bf16.msra.mxu0 0
    %1754 = vmatprep.subr.bf16.mxu0 0
    %1755 = vmatpush2.bf16.msra.mxu0 0
    %1756 = vmatprep.subr.bf16.mxu0 0
    %1757 = vmatpush2.bf16.msra.mxu0 0
    %1758 = vmatprep.subr.bf16.mxu0 0
    %1759 = vmatpush2.bf16.msra.mxu0 0
    %1760 = vmatprep.subr.bf16.mxu0 0
    %1761 = vmatpush2.bf16.msra.mxu0 0
    %1762 = vmatprep.subr.bf16.mxu0 0
    %1763 = vmatpush2.bf16.msra.mxu0 0
    %1764 = vmatprep.subr.bf16.mxu0 0
    %1765 = vmatpush2.bf16.msra.mxu0 0
    %1766 = vmatprep.subr.bf16.mxu0 0
    %1767 = vmatpush2.bf16.msra.mxu0 0
    %1768 = vmatprep.mubr.bf16.mxu0 0
    %1769 = vmatmul.mubr.bf16.gmra.mxu0 %v1734
    %v1770 = vpop.f32.mrf.mxu0
    %v1771 = vadd.f32 %v1707, %v1770
    %v1772 = vpop.f32.mrf.mxu0
    %v1773 = vpop.f32.mrf.mxu0
    %v1774 = vpop.f32.mrf.mxu0
    %1775 = vdwg.mxu0
    %1776 = vst [vmem:[%s10] sm:$0xff] %v1771
    // Predicated region
    $region54: #{sentence_classifier_forward.1} parent=1 // pred_check
      _
    $region55: #{sentence_classifier_forward.1} parent=1 // pred_check_branch
      %1778 = sbr.rel (0) target = $region57
    $region56: #{sentence_classifier_forward.1} parent=1 // pred_region
      _
    $region57: #{sentence_classifier_forward.1} parent=1 // pred_fallthru
      _
    // Predicated region
    $region58: #{sentence_classifier_forward.1} parent=1 // pred_check
      _
    $region59: #{sentence_classifier_forward.1} parent=1 // pred_check_branch
      %1780 = sbr.rel (0) target = $region61
    $region60: #{sentence_classifier_forward.1} parent=1 // pred_region
      _
    $region61: #{sentence_classifier_forward.1} parent=1 // pred_fallthru
      _
    %1781 = vsyncpa [#allocation3], 1
    %1782 = vsyncpa [#allocation5], 1

</llo_original>
